<compile_context>
chip_gen: v7x
topology: tpu7x:2x2x1
jax: 0.10.0
libtpu: 0.0.40
codegen_flags: <defaults>
</compile_context>

<pallas_src>
import math

import jax
import jax.numpy as jnp
from jax.experimental import pallas as pl
from jax.experimental.pallas import tpu as pltpu


_LANES = 128
_COLOR_MAX_ROWS = 256      # <=256 sublanes/tile keeps in+out blocks + temps ~4 MiB
_BRIGHT_MAX_ROWS = 2048    # 2048 x 128 x f32 = 1 MiB per block
_VMEM_LIMIT = 32 * 1024 * 1024   # explicit, leaves headroom on v7x (64 MiB physical)


def _round_up(x, m):
    return (x + m - 1) // m * m


def _largest_divisor(n, cap, step=8):
    """Largest multiple-of-`step` divisor of n that is <= cap (0 if none)."""
    t = cap - cap % step
    while t >= step:
        if n % t == 0:
            return t
        t -= step
    return 0


# ---------------------------------------------------------------------------
# In-kernel elementwise helpers (traced inside kernel bodies).
# ---------------------------------------------------------------------------
def _rgb_to_gray(r, g, b):
    # torchvision rgb_to_grayscale weights
    return 0.2989 * r + 0.587 * g + 0.114 * b


def _rgb_to_hsv(r, g, b):
    maxc = jnp.maximum(jnp.maximum(r, g), b)
    minc = jnp.minimum(jnp.minimum(r, g), b)
    eqc = maxc == minc
    cr = maxc - minc
    ones = jnp.ones_like(maxc)
    # cheap approx reciprocal is fine for 1/maxc; clamp s once instead of
    # clipping p/q/t three times in _hsv_to_rgb
    s = cr * pl.reciprocal(jnp.where(eqc, ones, maxc), approx=True)
    s = jnp.minimum(s, 1.0)
    # exact divide for 1/chroma: approx reciprocal amplifies hue error for
    # near-gray pixels (perf-review correctness concern)
    inv_cr = 1.0 / jnp.where(eqc, ones, cr)
    rc = (maxc - r) * inv_cr
    gc = (maxc - g) * inv_cr
    bc = (maxc - b) * inv_cr
    hr = jnp.where(maxc == r, bc - gc, 0.0)
    hg = jnp.where((maxc == g) & (maxc != r), 2.0 + rc - bc, 0.0)
    hb = jnp.where((maxc != g) & (maxc != r), 4.0 + gc - rc, 0.0)
    h = jnp.mod((hr + hg + hb) * (1.0 / 6.0) + 1.0, 1.0)
    return h, s, maxc


def _hsv_to_rgb(h, s, v):
    h6 = h * 6.0
    i = jnp.floor(h6)
    f = h6 - i
    i = jnp.mod(i, 6.0)
    # v, s in [0, 1]  =>  p, q, t in [0, 1]; no clips needed
    p = v * (1.0 - s)
    q = v * (1.0 - s * f)
    t = v * (1.0 - s * (1.0 - f))
    masks = [i == float(k) for k in range(5)]

    def sel(vals):
        out = vals[5]
        for k in range(4, -1, -1):
            out = jnp.where(masks[k], vals[k], out)
        return out

    r = sel([v, q, p, p, t, v])
    g = sel([t, v, v, q, p, p])
    b = sel([p, p, t, v, v, q])
    return r, g, b


# ---------------------------------------------------------------------------
# Pass 1 (color): per-image sum of brightness-adjusted grayscale.
# grid = (B, row_tiles); row axis is the reduction ("arbitrary", innermost).
#   params_ref (SMEM, prefetch): f32 [B, 4] -> [b_factor, c_factor, s_factor, hue]
# Output: f32 [B, 1, 128] partial lane sums (final lane reduce done in wrapper).
# ---------------------------------------------------------------------------
def _gray_sum_kernel(params_ref, img_ref, sum_ref):
    b = pl.program_id(0)
    r_idx = pl.program_id(1)
    bf = params_ref[b, 0]

    red = jnp.clip(img_ref[0, :, :].astype(jnp.float32) * bf, 0.0, 1.0)
    grn = jnp.clip(img_ref[1, :, :].astype(jnp.float32) * bf, 0.0, 1.0)
    blu = jnp.clip(img_ref[2, :, :].astype(jnp.float32) * bf, 0.0, 1.0)
    partial = jnp.sum(_rgb_to_gray(red, grn, blu), axis=0, keepdims=True)  # (1, 128)

    @pl.when(r_idx == 0)
    def _init():
        sum_ref[...] = jnp.zeros_like(sum_ref)

    sum_ref[...] += partial


# ---------------------------------------------------------------------------
# Pass 2 (color): row-tiled jitter.  grid = (B, row_tiles), both parallel.
#   flags_ref  (SMEM, prefetch): int32 [B]   per-image Bernoulli(0.8) gate
#   params_ref (SMEM, prefetch): f32  [B, 4]
#   means_ref  (SMEM, prefetch): f32  [B]    per-image contrast mean (pass 1)
# ---------------------------------------------------------------------------
def make_color_jitter_kernel(num_channels: int):
    def kernel(flags_ref, params_ref, means_ref, img_ref, out_ref):
        b = pl.program_id(0)           # program ids bound at top level only
        apply_jitter = flags_ref[b] > 0
        bf = params_ref[b, 0]
        cf = params_ref[b, 1]
        sf = params_ref[b, 2]
        hf = params_ref[b, 3]
        mean = means_ref[b]

        @pl.when(apply_jitter)
        def _jitter():
            r = img_ref[0, :, :].astype(jnp.float32)
            g = img_ref[1, :, :].astype(jnp.float32)
            bl = img_ref[2, :, :].astype(jnp.float32)

            # adjust_brightness: blend with zeros, clamp
            r = jnp.clip(r * bf, 0.0, 1.0)
            g = jnp.clip(g * bf, 0.0, 1.0)
            bl = jnp.clip(bl * bf, 0.0, 1.0)

            # adjust_contrast: blend with the per-image grayscale mean from
            # pass 1.  NOTE: zero-padded pixels contribute exactly 0 to the
            # pass-1 sum (clip(0*bf) == 0) and we divide by the true H*W, so
            # the mean stays exact -- padding must remain zero.
            r = jnp.clip(cf * r + (1.0 - cf) * mean, 0.0, 1.0)
            g = jnp.clip(cf * g + (1.0 - cf) * mean, 0.0, 1.0)
            bl = jnp.clip(cf * bl + (1.0 - cf) * mean, 0.0, 1.0)

            # adjust_saturation: blend with grayscale image
            gray = _rgb_to_gray(r, g, bl)
            r = jnp.clip(sf * r + (1.0 - sf) * gray, 0.0, 1.0)
            g = jnp.clip(sf * g + (1.0 - sf) * gray, 0.0, 1.0)
            bl = jnp.clip(sf * bl + (1.0 - sf) * gray, 0.0, 1.0)

            # adjust_hue: RGB -> HSV -> shift -> RGB
            h, s, v = _rgb_to_hsv(r, g, bl)
            h = jnp.mod(h + hf, 1.0)
            r, g, bl = _hsv_to_rgb(h, s, v)

            out_ref[0, :, :] = r.astype(out_ref.dtype)
            out_ref[1, :, :] = g.astype(out_ref.dtype)
            out_ref[2, :, :] = bl.astype(out_ref.dtype)
            # channels >= 3 pass through untouched (no wrapper concat).
            # TODO(synk): with donated buffers this copy could be dropped via
            # input_output_aliases so extra channels never move through VMEM.
            for c in range(3, num_channels):
                out_ref[c, :, :] = img_ref[c, :, :]

        @pl.when(jnp.logical_not(apply_jitter))
        def _copy():
            out_ref[...] = img_ref[...]

    return kernel


# ---------------------------------------------------------------------------
# Brightness-noise kernel: (rows_tile, 128) block per grid step.
#   seed_ref (SMEM, prefetch): int32 [1]
# Noise is generated in-kernel with a counter-based int32 hash (VPU-only) so
# the memory-bound pass reads the input exactly once from HBM.
# TODO(synk): Irwin-Hall(6) sum-of-uniforms approximates torch.randn (exact
# variance, tails truncated at ~4.2 sigma).
# ---------------------------------------------------------------------------
def make_brightness_noise_kernel(noise_std: float, n_uniform: int = 6):
    s = (12.0 / n_uniform) ** 0.5
    a = noise_std * s / float(1 << 24)        # per-count scale
    c = noise_std * s * (n_uniform * 0.5)     # mean shift

    def _mix(x):
        # 2-round multiply/xorshift integer mixer (wrapping int32 arithmetic)
        x = jnp.bitwise_xor(x, jnp.right_shift(x, 16))
        x = x * jnp.int32(0x045D9F3B)
        x = jnp.bitwise_xor(x, jnp.right_shift(x, 15))
        x = x * jnp.int32(0x2C1B3C6D)
        x = jnp.bitwise_xor(x, jnp.right_shift(x, 16))
        return x

    def kernel(seed_ref, x_ref, o_ref):
        step = pl.program_id(0)                # bound at top level, NOT in pl.when
        rt, ln = x_ref.shape
        row = jax.lax.broadcasted_iota(jnp.int32, (rt, ln), 0)
        col = jax.lax.broadcasted_iota(jnp.int32, (rt, ln), 1)
        # globally unique element id -> same noise regardless of tiling /
        # megacore execution order
        idx = (step * rt + row) * ln + col
        state = jnp.bitwise_xor(idx, seed_ref[0])

        acc = jnp.zeros((rt, ln), jnp.int32)
        for k in range(n_uniform):             # static unroll, VPU-only work
            ck = (0x68E31DA4 + k * 0x3243F6A9) & 0xFFFFFFFF
            if ck >= (1 << 31):
                ck -= 1 << 32
            state = _mix(state + jnp.int32(ck))
            acc = acc + jnp.bitwise_and(jnp.right_shift(state, 7),
                                        jnp.int32(0x00FFFFFF))

        noise = acc.astype(jnp.float32) * a - c
        x = x_ref[...].astype(jnp.float32)
        o_ref[...] = jnp.clip(x + noise, 0.0, 1.0).astype(o_ref.dtype)

    return kernel


# ---------------------------------------------------------------------------
# Wrappers
# ---------------------------------------------------------------------------
def _apply_color_jitter(color, apply_flags, params):
    B, C, H, W = color.shape
    hw = H * W

    if hw % _LANES == 0:
        hw_pad = hw
        col = color.reshape(B, C, hw // _LANES, _LANES)
    else:
        # ragged-tail fallback only; zero padding keeps the contrast mean exact
        hw_pad = _round_up(hw, _LANES)
        col = jnp.pad(color.reshape(B, C, hw), ((0, 0), (0, 0), (0, hw_pad - hw)))
        col = col.reshape(B, C, hw_pad // _LANES, _LANES)

    rows = hw_pad // _LANES
    if rows <= _COLOR_MAX_ROWS:
        row_tile = rows
    else:
        row_tile = _largest_divisor(rows, _COLOR_MAX_ROWS) or rows
    n_row_tiles = rows // row_tile

    # pass 1: per-image sum of brightness-adjusted grayscale (contrast mean)
    gray_sums = pl.pallas_call(
        _gray_sum_kernel,
        out_shape=jax.ShapeDtypeStruct((B, 1, _LANES), jnp.float32),
        grid_spec=pltpu.PrefetchScalarGridSpec(
            num_scalar_prefetch=1,
            grid=(B, n_row_tiles),
            in_specs=[pl.BlockSpec((None, 3, row_tile, _LANES),
                                   lambda b, r, p: (b, 0, r, 0))],
            out_specs=pl.BlockSpec((None, 1, _LANES),
                                   lambda b, r, p: (b, 0, 0)),
        ),
        compiler_params=pltpu.CompilerParams(
            dimension_semantics=("parallel", "arbitrary"),
            vmem_limit_bytes=_VMEM_LIMIT),
    )(params, col)
    means = (jnp.sum(gray_sums.reshape(B, _LANES), axis=-1)
             * (1.0 / float(hw))).astype(jnp.float32)

    # pass 2: row-tiled jitter
    jittered = pl.pallas_call(
        make_color_jitter_kernel(C),
        out_shape=jax.ShapeDtypeStruct(col.shape, col.dtype),
        grid_spec=pltpu.PrefetchScalarGridSpec(
            num_scalar_prefetch=3,
            grid=(B, n_row_tiles),
            in_specs=[pl.BlockSpec((None, C, row_tile, _LANES),
                                   lambda b, r, f, p, m: (b, 0, r, 0))],
            out_specs=pl.BlockSpec((None, C, row_tile, _LANES),
                                   lambda b, r, f, p, m: (b, 0, r, 0)),
        ),
        compiler_params=pltpu.CompilerParams(
            dimension_semantics=("parallel", "parallel"),
            vmem_limit_bytes=_VMEM_LIMIT),
    )(apply_flags, params, means, col)

    if hw_pad != hw:
        return jittered.reshape(B, C, hw_pad)[:, :, :hw].reshape(B, C, H, W)
    return jittered.reshape(B, C, H, W)


def _apply_brightness_noise(bright, seed, noise_std):
    shape = bright.shape
    n = math.prod(shape)
    rows = pl.cdiv(n, _LANES)

    if rows <= 16:
        tile, rows_pad = rows, rows
    else:
        # aim for ~8 grid steps (>=2 so both v7x TensorCores get work), each a
        # multiple of 8 sublanes, capped at ~1 MiB per block
        cap = min(_BRIGHT_MAX_ROWS, max(8, _round_up(pl.cdiv(rows, 8), 8)))
        tile = _largest_divisor(rows, cap)
        if tile:
            rows_pad = rows
        else:
            tile = cap
            rows_pad = _round_up(rows, tile)
    total = rows_pad * _LANES

    flat = bright.reshape(-1)
    if total != n:
        flat = jnp.pad(flat, (0, total - n))   # ragged-tail fallback only
    x2 = flat.reshape(rows_pad, _LANES)

    noisy = pl.pallas_call(
        make_brightness_noise_kernel(noise_std),
        out_shape=jax.ShapeDtypeStruct((rows_pad, _LANES), bright.dtype),
        grid_spec=pltpu.PrefetchScalarGridSpec(
            num_scalar_prefetch=1,
            grid=(rows_pad // tile,),
            in_specs=[pl.BlockSpec((tile, _LANES), lambda i, s: (i, 0))],
            out_specs=pl.BlockSpec((tile, _LANES), lambda i, s: (i, 0)),
        ),
        compiler_params=pltpu.CompilerParams(
            dimension_semantics=("parallel",),
            vmem_limit_bytes=_VMEM_LIMIT),
    )(seed, x2)

    if total != n:
        return noisy.reshape(-1)[:n].reshape(shape)
    return noisy.reshape(shape)


def multi_stream_augmentation(color, brightness, key):
    """Reproduces MultiStreamAugmentation().forward(color, brightness)."""
    B, C = color.shape[0], color.shape[1]

    # ColorJitter() defaults -> BaseAugmentation(color_jitter_strength=0.1)
    strength = 0.1
    bcs = strength * 0.8     # brightness / contrast / saturation range = 0.08
    hue_r = strength * 0.2   # hue range = 0.02
    noise_std = 0.01         # BrightnessNoise default

    keys = jax.random.split(key, 7)
    apply_jitter = (jax.random.uniform(keys[0], (B,)) < 0.8).astype(jnp.int32)
    bf = jax.random.uniform(keys[1], (B,), minval=1.0 - bcs, maxval=1.0 + bcs)
    cf = jax.random.uniform(keys[2], (B,), minval=1.0 - bcs, maxval=1.0 + bcs)
    sf = jax.random.uniform(keys[3], (B,), minval=1.0 - bcs, maxval=1.0 + bcs)
    hf = jax.random.uniform(keys[4], (B,), minval=-hue_r, maxval=hue_r)
    params = jnp.stack([bf, cf, sf, hf], axis=1).astype(jnp.float32)

    apply_noise = jax.random.uniform(keys[5], ()) < 0.3            # scalar bool
    noise_seed = jax.random.randint(keys[6], (1,), 0,
                                    jnp.iinfo(jnp.int32).max, dtype=jnp.int32)

    # ---- color stream: jitter the first 3 channels with p=0.8 per image ----
    if C >= 3:
        color_out = _apply_color_jitter(color, apply_jitter, params)
    else:
        color_out = color   # torch module only jitters when there are >= 3 channels

    # ---- brightness stream: with p=0.3 add N(0, std^2) noise and clamp ----
    # lax.cond skips the whole memory-bound kernel 70% of the time instead of
    # running it as an identity memcpy.
    brightness_out = jax.lax.cond(
        apply_noise,
        lambda args: _apply_brightness_noise(args[0], args[1], noise_std),
        lambda args: args[0],
        (brightness, noise_seed))

    return color_out, brightness_out


if __name__ == "__main__":
    key = jax.random.PRNGKey(0)
    k_c, k_b, k_aug = jax.random.split(key, 3)

    B, C, H, W = 2, 4, 16, 16   # C=4 exercises the pass-through channel path
    color = jax.random.uniform(k_c, (B, C, H, W), dtype=jnp.float32)
    brightness = jax.random.uniform(k_b, (B, 1, H, W), dtype=jnp.float32)

    aug = jax.jit(multi_stream_augmentation)
    color_out, bright_out = aug(color, brightness, k_aug)
    jax.block_until_ready((color_out, bright_out))

    assert color_out.shape == color.shape
    assert bright_out.shape == brightness.shape
    assert bool(jnp.all(jnp.isfinite(color_out)))
    assert bool(jnp.all(jnp.isfinite(bright_out)))
    # outputs stay in [0, 1]; channels >= 3 must pass through untouched
    assert bool(jnp.all((color_out >= 0.0) & (color_out <= 1.0)))
    assert bool(jnp.all((bright_out >= 0.0) & (bright_out <= 1.0)))
    assert bool(jnp.all(color_out[:, 3:] == color[:, 3:]))
    print("KERNEL_OK")
</pallas_src>

<mosaic_0001>
module attributes {stable_mosaic.version = 11 : i64} {
  func.func @_gray_sum_kernel(%arg0: i32, %arg1: i32, %arg2: memref<2x4xf32, #tpu.memory_space<smem>>, %arg3: memref<1x3x2x128xf32, #tpu.memory_space<vmem>>, %arg4: memref<1x1x128xf32, #tpu.memory_space<vmem>>) attributes {dimension_semantics = [#tpu.dimension_semantics<parallel>, #tpu.dimension_semantics<arbitrary>], iteration_bounds = array<i64: 2, 1>, scalar_prefetch = 1 : i64, scratch_operands = 0 : i64, tpu.core_type = #tpu.core_type<tc>, window_params = [{transform_indices = @transform_0, window_bounds = array<i64: 1, 3, 2, 128>}, {transform_indices = @transform_1, window_bounds = array<i64: 1, 1, 128>}]} {
    %0 = arith.index_cast %arg0 : i32 to index
    %c0 = arith.constant 0 : index
    %1 = memref.load %arg2[%0, %c0] : memref<2x4xf32, #tpu.memory_space<smem>>
    %c0_0 = arith.constant 0 : index
    %c0_1 = arith.constant 0 : index
    %c0_2 = arith.constant 0 : index
    %c0_3 = arith.constant 0 : index
    %2 = vector.load %arg3[%c0_0, %c0_1, %c0_2, %c0_3] : memref<1x3x2x128xf32, #tpu.memory_space<vmem>>, vector<1x1x2x128xf32>
    %3 = vector.shape_cast %2 : vector<1x1x2x128xf32> to vector<2x128xf32>
    %4 = vector.broadcast %1 : f32 to vector<2x128xf32>
    %5 = arith.mulf %3, %4 : vector<2x128xf32>
    %cst = arith.constant 0.000000e+00 : f32
    %cst_4 = arith.constant 1.000000e+00 : f32
    %6 = vector.broadcast %cst : f32 to vector<2x128xf32>
    %7 = arith.maximumf %6, %5 : vector<2x128xf32>
    %8 = vector.broadcast %cst_4 : f32 to vector<2x128xf32>
    %9 = arith.minimumf %8, %7 : vector<2x128xf32>
    %c0_5 = arith.constant 0 : index
    %c1 = arith.constant 1 : index
    %c0_6 = arith.constant 0 : index
    %c0_7 = arith.constant 0 : index
    %10 = vector.load %arg3[%c0_5, %c1, %c0_6, %c0_7] : memref<1x3x2x128xf32, #tpu.memory_space<vmem>>, vector<1x1x2x128xf32>
    %11 = vector.shape_cast %10 : vector<1x1x2x128xf32> to vector<2x128xf32>
    %12 = vector.broadcast %1 : f32 to vector<2x128xf32>
    %13 = arith.mulf %11, %12 : vector<2x128xf32>
    %cst_8 = arith.constant 0.000000e+00 : f32
    %cst_9 = arith.constant 1.000000e+00 : f32
    %14 = vector.broadcast %cst_8 : f32 to vector<2x128xf32>
    %15 = arith.maximumf %14, %13 : vector<2x128xf32>
    %16 = vector.broadcast %cst_9 : f32 to vector<2x128xf32>
    %17 = arith.minimumf %16, %15 : vector<2x128xf32>
    %c0_10 = arith.constant 0 : index
    %c2 = arith.constant 2 : index
    %c0_11 = arith.constant 0 : index
    %c0_12 = arith.constant 0 : index
    %18 = vector.load %arg3[%c0_10, %c2, %c0_11, %c0_12] : memref<1x3x2x128xf32, #tpu.memory_space<vmem>>, vector<1x1x2x128xf32>
    %19 = vector.shape_cast %18 : vector<1x1x2x128xf32> to vector<2x128xf32>
    %20 = vector.broadcast %1 : f32 to vector<2x128xf32>
    %21 = arith.mulf %19, %20 : vector<2x128xf32>
    %cst_13 = arith.constant 0.000000e+00 : f32
    %cst_14 = arith.constant 1.000000e+00 : f32
    %22 = vector.broadcast %cst_13 : f32 to vector<2x128xf32>
    %23 = arith.maximumf %22, %21 : vector<2x128xf32>
    %24 = vector.broadcast %cst_14 : f32 to vector<2x128xf32>
    %25 = arith.minimumf %24, %23 : vector<2x128xf32>
    %cst_15 = arith.constant 2.989000e-01 : f32
    %26 = vector.broadcast %cst_15 : f32 to vector<2x128xf32>
    %27 = arith.mulf %26, %9 : vector<2x128xf32>
    %cst_16 = arith.constant 5.870000e-01 : f32
    %28 = vector.broadcast %cst_16 : f32 to vector<2x128xf32>
    %29 = arith.mulf %28, %17 : vector<2x128xf32>
    %30 = arith.addf %27, %29 : vector<2x128xf32>
    %cst_17 = arith.constant 1.140000e-01 : f32
    %31 = vector.broadcast %cst_17 : f32 to vector<2x128xf32>
    %32 = arith.mulf %31, %25 : vector<2x128xf32>
    %33 = arith.addf %30, %32 : vector<2x128xf32>
    %cst_18 = arith.constant dense<0.000000e+00> : vector<128xf32>
    %34 = vector.multi_reduction <add>, %33, %cst_18 [0] : vector<2x128xf32> to vector<128xf32>
    %35 = vector.shape_cast %34 : vector<128xf32> to vector<1x128xf32>
    %c0_i32 = arith.constant 0 : i32
    %36 = arith.cmpi eq, %arg1, %c0_i32 : i32
    %37 = arith.extui %36 : i1 to i32
    %c0_i32_19 = arith.constant 0 : i32
    %38 = arith.cmpi ne, %37, %c0_i32_19 : i32
    scf.if %38 {
      %cst_26 = arith.constant 0.000000e+00 : f32
      %45 = vector.broadcast %cst_26 : f32 to vector<1x128xf32>
      %c0_27 = arith.constant 0 : index
      %c0_28 = arith.constant 0 : index
      %c0_29 = arith.constant 0 : index
      %46 = vector.load %arg4[%c0_27, %c0_28, %c0_29] : memref<1x1x128xf32, #tpu.memory_space<vmem>>, vector<1x1x128xf32>
      %47 = vector.shape_cast %46 : vector<1x1x128xf32> to vector<1x128xf32>
      %48 = vector.shape_cast %45 : vector<1x128xf32> to vector<1x1x128xf32>
      tpu.vector_store %arg4[%c0_27, %c0_28, %c0_29], %48 {strides = array<i32>} : memref<1x1x128xf32, #tpu.memory_space<vmem>>, vector<1x1x128xf32>,
    } else {
    }
    %c0_20 = arith.constant 0 : index
    %c0_21 = arith.constant 0 : index
    %c0_22 = arith.constant 0 : index
    %39 = vector.load %arg4[%c0_20, %c0_21, %c0_22] : memref<1x1x128xf32, #tpu.memory_space<vmem>>, vector<1x1x128xf32>
    %40 = vector.shape_cast %39 : vector<1x1x128xf32> to vector<1x128xf32>
    %41 = arith.addf %40, %35 : vector<1x128xf32>
    %c0_23 = arith.constant 0 : index
    %c0_24 = arith.constant 0 : index
    %c0_25 = arith.constant 0 : index
    %42 = vector.load %arg4[%c0_23, %c0_24, %c0_25] : memref<1x1x128xf32, #tpu.memory_space<vmem>>, vector<1x1x128xf32>
    %43 = vector.shape_cast %42 : vector<1x1x128xf32> to vector<1x128xf32>
    %44 = vector.shape_cast %41 : vector<1x128xf32> to vector<1x1x128xf32>
    tpu.vector_store %arg4[%c0_23, %c0_24, %c0_25], %44 {strides = array<i32>} : memref<1x1x128xf32, #tpu.memory_space<vmem>>, vector<1x1x128xf32>,
    return
  }
  func.func @transform_0(%arg0: i32, %arg1: i32, %arg2: memref<2x4xf32, #tpu.memory_space<smem>>) -> (i32, i32, i32, i32) {
    %c0_i32 = arith.constant 0 : i32
    %c0_i32_0 = arith.constant 0 : i32
    %c0_i32_1 = arith.constant 0 : i32
    return %arg0, %c0_i32, %arg1, %c0_i32_0 : i32, i32, i32, i32
  }
  func.func @transform_1(%arg0: i32, %arg1: i32, %arg2: memref<2x4xf32, #tpu.memory_space<smem>>) -> (i32, i32, i32) {
    %c0_i32 = arith.constant 0 : i32
    %c0_i32_0 = arith.constant 0 : i32
    %c0_i32_1 = arith.constant 0 : i32
    return %arg0, %c0_i32, %c0_i32_0 : i32, i32, i32
  }
}

module attributes {stable_mosaic.version = 11 : i64} {
  func.func @kernel(%arg0: i32, %arg1: i32, %arg2: memref<2xi32, #tpu.memory_space<smem>>, %arg3: memref<2x4xf32, #tpu.memory_space<smem>>, %arg4: memref<2xf32, #tpu.memory_space<smem>>, %arg5: memref<1x4x2x128xf32, #tpu.memory_space<vmem>>, %arg6: memref<1x4x2x128xf32, #tpu.memory_space<vmem>>) attributes {dimension_semantics = [#tpu.dimension_semantics<parallel>, #tpu.dimension_semantics<parallel>], iteration_bounds = array<i64: 2, 1>, scalar_prefetch = 3 : i64, scratch_operands = 0 : i64, tpu.core_type = #tpu.core_type<tc>, window_params = [{transform_indices = @transform_0, window_bounds = array<i64: 1, 4, 2, 128>}, {transform_indices = @transform_1, window_bounds = array<i64: 1, 4, 2, 128>}]} {
    %0 = arith.index_cast %arg0 : i32 to index
    %1 = memref.load %arg2[%0] : memref<2xi32, #tpu.memory_space<smem>>
    %c0_i32 = arith.constant 0 : i32
    %2 = arith.cmpi sgt, %1, %c0_i32 : i32
    %3 = arith.index_cast %arg0 : i32 to index
    %c0 = arith.constant 0 : index
    %4 = memref.load %arg3[%3, %c0] : memref<2x4xf32, #tpu.memory_space<smem>>
    %5 = arith.index_cast %arg0 : i32 to index
    %c1 = arith.constant 1 : index
    %6 = memref.load %arg3[%5, %c1] : memref<2x4xf32, #tpu.memory_space<smem>>
    %7 = arith.index_cast %arg0 : i32 to index
    %c2 = arith.constant 2 : index
    %8 = memref.load %arg3[%7, %c2] : memref<2x4xf32, #tpu.memory_space<smem>>
    %9 = arith.index_cast %arg0 : i32 to index
    %c3 = arith.constant 3 : index
    %10 = memref.load %arg3[%9, %c3] : memref<2x4xf32, #tpu.memory_space<smem>>
    %11 = arith.index_cast %arg0 : i32 to index
    %12 = memref.load %arg4[%11] : memref<2xf32, #tpu.memory_space<smem>>
    %13 = arith.extui %2 : i1 to i32
    %c0_i32_0 = arith.constant 0 : i32
    %14 = arith.cmpi ne, %13, %c0_i32_0 : i32
    scf.if %14 {
      %c0_2 = arith.constant 0 : index
      %c0_3 = arith.constant 0 : index
      %c0_4 = arith.constant 0 : index
      %c0_5 = arith.constant 0 : index
      %18 = vector.load %arg5[%c0_2, %c0_3, %c0_4, %c0_5] : memref<1x4x2x128xf32, #tpu.memory_space<vmem>>, vector<1x1x2x128xf32>
      %19 = vector.shape_cast %18 : vector<1x1x2x128xf32> to vector<2x128xf32>
      %c0_6 = arith.constant 0 : index
      %c1_7 = arith.constant 1 : index
      %c0_8 = arith.constant 0 : index
      %c0_9 = arith.constant 0 : index
      %20 = vector.load %arg5[%c0_6, %c1_7, %c0_8, %c0_9] : memref<1x4x2x128xf32, #tpu.memory_space<vmem>>, vector<1x1x2x128xf32>
      %21 = vector.shape_cast %20 : vector<1x1x2x128xf32> to vector<2x128xf32>
      %c0_10 = arith.constant 0 : index
      %c2_11 = arith.constant 2 : index
      %c0_12 = arith.constant 0 : index
      %c0_13 = arith.constant 0 : index
      %22 = vector.load %arg5[%c0_10, %c2_11, %c0_12, %c0_13] : memref<1x4x2x128xf32, #tpu.memory_space<vmem>>, vector<1x1x2x128xf32>
      %23 = vector.shape_cast %22 : vector<1x1x2x128xf32> to vector<2x128xf32>
      %24 = vector.broadcast %4 : f32 to vector<2x128xf32>
      %25 = arith.mulf %19, %24 : vector<2x128xf32>
      %cst = arith.constant 0.000000e+00 : f32
      %cst_14 = arith.constant 1.000000e+00 : f32
      %26 = vector.broadcast %cst : f32 to vector<2x128xf32>
      %27 = arith.maximumf %26, %25 : vector<2x128xf32>
      %28 = vector.broadcast %cst_14 : f32 to vector<2x128xf32>
      %29 = arith.minimumf %28, %27 : vector<2x128xf32>
      %30 = vector.broadcast %4 : f32 to vector<2x128xf32>
      %31 = arith.mulf %21, %30 : vector<2x128xf32>
      %cst_15 = arith.constant 0.000000e+00 : f32
      %cst_16 = arith.constant 1.000000e+00 : f32
      %32 = vector.broadcast %cst_15 : f32 to vector<2x128xf32>
      %33 = arith.maximumf %32, %31 : vector<2x128xf32>
      %34 = vector.broadcast %cst_16 : f32 to vector<2x128xf32>
      %35 = arith.minimumf %34, %33 : vector<2x128xf32>
      %36 = vector.broadcast %4 : f32 to vector<2x128xf32>
      %37 = arith.mulf %23, %36 : vector<2x128xf32>
      %cst_17 = arith.constant 0.000000e+00 : f32
      %cst_18 = arith.constant 1.000000e+00 : f32
      %38 = vector.broadcast %cst_17 : f32 to vector<2x128xf32>
      %39 = arith.maximumf %38, %37 : vector<2x128xf32>
      %40 = vector.broadcast %cst_18 : f32 to vector<2x128xf32>
      %41 = arith.minimumf %40, %39 : vector<2x128xf32>
      %42 = vector.broadcast %6 : f32 to vector<2x128xf32>
      %43 = arith.mulf %42, %29 : vector<2x128xf32>
      %cst_19 = arith.constant 1.000000e+00 : f32
      %44 = arith.subf %cst_19, %6 : f32
      %45 = arith.mulf %44, %12 : f32
      %46 = vector.broadcast %45 : f32 to vector<2x128xf32>
      %47 = arith.addf %43, %46 : vector<2x128xf32>
      %cst_20 = arith.constant 0.000000e+00 : f32
      %cst_21 = arith.constant 1.000000e+00 : f32
      %48 = vector.broadcast %cst_20 : f32 to vector<2x128xf32>
      %49 = arith.maximumf %48, %47 : vector<2x128xf32>
      %50 = vector.broadcast %cst_21 : f32 to vector<2x128xf32>
      %51 = arith.minimumf %50, %49 : vector<2x128xf32>
      %52 = vector.broadcast %6 : f32 to vector<2x128xf32>
      %53 = arith.mulf %52, %35 : vector<2x128xf32>
      %cst_22 = arith.constant 1.000000e+00 : f32
      %54 = arith.subf %cst_22, %6 : f32
      %55 = arith.mulf %54, %12 : f32
      %56 = vector.broadcast %55 : f32 to vector<2x128xf32>
      %57 = arith.addf %53, %56 : vector<2x128xf32>
      %cst_23 = arith.constant 0.000000e+00 : f32
      %cst_24 = arith.constant 1.000000e+00 : f32
      %58 = vector.broadcast %cst_23 : f32 to vector<2x128xf32>
      %59 = arith.maximumf %58, %57 : vector<2x128xf32>
      %60 = vector.broadcast %cst_24 : f32 to vector<2x128xf32>
      %61 = arith.minimumf %60, %59 : vector<2x128xf32>
      %62 = vector.broadcast %6 : f32 to vector<2x128xf32>
      %63 = arith.mulf %62, %41 : vector<2x128xf32>
      %cst_25 = arith.constant 1.000000e+00 : f32
      %64 = arith.subf %cst_25, %6 : f32
      %65 = arith.mulf %64, %12 : f32
      %66 = vector.broadcast %65 : f32 to vector<2x128xf32>
      %67 = arith.addf %63, %66 : vector<2x128xf32>
      %cst_26 = arith.constant 0.000000e+00 : f32
      %cst_27 = arith.constant 1.000000e+00 : f32
      %68 = vector.broadcast %cst_26 : f32 to vector<2x128xf32>
      %69 = arith.maximumf %68, %67 : vector<2x128xf32>
      %70 = vector.broadcast %cst_27 : f32 to vector<2x128xf32>
      %71 = arith.minimumf %70, %69 : vector<2x128xf32>
      %cst_28 = arith.constant 2.989000e-01 : f32
      %72 = vector.broadcast %cst_28 : f32 to vector<2x128xf32>
      %73 = arith.mulf %72, %51 : vector<2x128xf32>
      %cst_29 = arith.constant 5.870000e-01 : f32
      %74 = vector.broadcast %cst_29 : f32 to vector<2x128xf32>
      %75 = arith.mulf %74, %61 : vector<2x128xf32>
      %76 = arith.addf %73, %75 : vector<2x128xf32>
      %cst_30 = arith.constant 1.140000e-01 : f32
      %77 = vector.broadcast %cst_30 : f32 to vector<2x128xf32>
      %78 = arith.mulf %77, %71 : vector<2x128xf32>
      %79 = arith.addf %76, %78 : vector<2x128xf32>
      %80 = vector.broadcast %8 : f32 to vector<2x128xf32>
      %81 = arith.mulf %80, %51 : vector<2x128xf32>
      %cst_31 = arith.constant 1.000000e+00 : f32
      %82 = arith.subf %cst_31, %8 : f32
      %83 = vector.broadcast %82 : f32 to vector<2x128xf32>
      %84 = arith.mulf %83, %79 : vector<2x128xf32>
      %85 = arith.addf %81, %84 : vector<2x128xf32>
      %cst_32 = arith.constant 0.000000e+00 : f32
      %cst_33 = arith.constant 1.000000e+00 : f32
      %86 = vector.broadcast %cst_32 : f32 to vector<2x128xf32>
      %87 = arith.maximumf %86, %85 : vector<2x128xf32>
      %88 = vector.broadcast %cst_33 : f32 to vector<2x128xf32>
      %89 = arith.minimumf %88, %87 : vector<2x128xf32>
      %90 = vector.broadcast %8 : f32 to vector<2x128xf32>
      %91 = arith.mulf %90, %61 : vector<2x128xf32>
      %cst_34 = arith.constant 1.000000e+00 : f32
      %92 = arith.subf %cst_34, %8 : f32
      %93 = vector.broadcast %92 : f32 to vector<2x128xf32>
      %94 = arith.mulf %93, %79 : vector<2x128xf32>
      %95 = arith.addf %91, %94 : vector<2x128xf32>
      %cst_35 = arith.constant 0.000000e+00 : f32
      %cst_36 = arith.constant 1.000000e+00 : f32
      %96 = vector.broadcast %cst_35 : f32 to vector<2x128xf32>
      %97 = arith.maximumf %96, %95 : vector<2x128xf32>
      %98 = vector.broadcast %cst_36 : f32 to vector<2x128xf32>
      %99 = arith.minimumf %98, %97 : vector<2x128xf32>
      %100 = vector.broadcast %8 : f32 to vector<2x128xf32>
      %101 = arith.mulf %100, %71 : vector<2x128xf32>
      %cst_37 = arith.constant 1.000000e+00 : f32
      %102 = arith.subf %cst_37, %8 : f32
      %103 = vector.broadcast %102 : f32 to vector<2x128xf32>
      %104 = arith.mulf %103, %79 : vector<2x128xf32>
      %105 = arith.addf %101, %104 : vector<2x128xf32>
      %cst_38 = arith.constant 0.000000e+00 : f32
      %cst_39 = arith.constant 1.000000e+00 : f32
      %106 = vector.broadcast %cst_38 : f32 to vector<2x128xf32>
      %107 = arith.maximumf %106, %105 : vector<2x128xf32>
      %108 = vector.broadcast %cst_39 : f32 to vector<2x128xf32>
      %109 = arith.minimumf %108, %107 : vector<2x128xf32>
      %110 = arith.maximumf %89, %99 : vector<2x128xf32>
      %111 = arith.maximumf %110, %109 : vector<2x128xf32>
      %112 = arith.minimumf %89, %99 : vector<2x128xf32>
      %113 = arith.minimumf %112, %109 : vector<2x128xf32>
      %114 = arith.cmpf oeq, %111, %113 : vector<2x128xf32>
      %115 = arith.subf %111, %113 : vector<2x128xf32>
      %cst_40 = arith.constant 1.000000e+00 : f32
      %116 = vector.broadcast %cst_40 : f32 to vector<2x128xf32>
      %117 = arith.select %114, %116, %111 : vector<2x128xi1>, vector<2x128xf32>
      %118 = tpu.reciprocal %117 {approx = true} : vector<2x128xf32> -> vector<2x128xf32>
      %119 = arith.mulf %115, %118 : vector<2x128xf32>
      %cst_41 = arith.constant 1.000000e+00 : f32
      %120 = vector.broadcast %cst_41 : f32 to vector<2x128xf32>
      %121 = arith.minimumf %119, %120 : vector<2x128xf32>
      %122 = arith.select %114, %116, %115 : vector<2x128xi1>, vector<2x128xf32>
      %cst_42 = arith.constant 1.000000e+00 : f32
      %123 = vector.broadcast %cst_42 : f32 to vector<2x128xf32>
      %124 = arith.divf %123, %122 : vector<2x128xf32>
      %125 = arith.subf %111, %89 : vector<2x128xf32>
      %126 = arith.mulf %125, %124 : vector<2x128xf32>
      %127 = arith.subf %111, %99 : vector<2x128xf32>
      %128 = arith.mulf %127, %124 : vector<2x128xf32>
      %129 = arith.subf %111, %109 : vector<2x128xf32>
      %130 = arith.mulf %129, %124 : vector<2x128xf32>
      %131 = arith.cmpf oeq, %111, %89 : vector<2x128xf32>
      %132 = arith.subf %130, %128 : vector<2x128xf32>
      %cst_43 = arith.constant 0.000000e+00 : f32
      %133 = vector.broadcast %cst_43 : f32 to vector<2x128xf32>
      %134 = arith.select %131, %132, %133 : vector<2x128xi1>, vector<2x128xf32>
      %135 = arith.cmpf oeq, %111, %99 : vector<2x128xf32>
      %136 = arith.cmpf one, %111, %89 : vector<2x128xf32>
      %137 = arith.andi %135, %136 : vector<2x128xi1>
      %cst_44 = arith.constant 2.000000e+00 : f32
      %138 = vector.broadcast %cst_44 : f32 to vector<2x128xf32>
      %139 = arith.addf %138, %126 : vector<2x128xf32>
      %140 = arith.subf %139, %130 : vector<2x128xf32>
      %cst_45 = arith.constant 0.000000e+00 : f32
      %141 = vector.broadcast %cst_45 : f32 to vector<2x128xf32>
      %142 = arith.select %137, %140, %141 : vector<2x128xi1>, vector<2x128xf32>
      %143 = arith.cmpf one, %111, %99 : vector<2x128xf32>
      %144 = arith.cmpf one, %111, %89 : vector<2x128xf32>
      %145 = arith.andi %143, %144 : vector<2x128xi1>
      %cst_46 = arith.constant 4.000000e+00 : f32
      %146 = vector.broadcast %cst_46 : f32 to vector<2x128xf32>
      %147 = arith.addf %146, %128 : vector<2x128xf32>
      %148 = arith.subf %147, %126 : vector<2x128xf32>
      %cst_47 = arith.constant 0.000000e+00 : f32
      %149 = vector.broadcast %cst_47 : f32 to vector<2x128xf32>
      %150 = arith.select %145, %148, %149 : vector<2x128xi1>, vector<2x128xf32>
      %151 = arith.addf %134, %142 : vector<2x128xf32>
      %152 = arith.addf %151, %150 : vector<2x128xf32>
      %cst_48 = arith.constant 0.166666672 : f32
      %153 = vector.broadcast %cst_48 : f32 to vector<2x128xf32>
      %154 = arith.mulf %152, %153 : vector<2x128xf32>
      %cst_49 = arith.constant 1.000000e+00 : f32
      %155 = vector.broadcast %cst_49 : f32 to vector<2x128xf32>
      %156 = arith.addf %154, %155 : vector<2x128xf32>
      %cst_50 = arith.constant 1.000000e+00 : f32
      %157 = vector.broadcast %cst_50 : f32 to vector<2x128xf32>
      %158 = arith.remf %156, %157 : vector<2x128xf32>
      %cst_51 = arith.constant 0.000000e+00 : f32
      %159 = vector.broadcast %cst_51 : f32 to vector<2x128xf32>
      %160 = arith.cmpf one, %158, %159 : vector<2x128xf32>
      %cst_52 = arith.constant 0.000000e+00 : f32
      %161 = vector.broadcast %cst_52 : f32 to vector<2x128xf32>
      %162 = arith.cmpf olt, %158, %161 : vector<2x128xf32>
      %cst_53 = arith.constant 0.000000e+00 : f32
      %163 = arith.cmpf olt, %cst_50, %cst_53 : f32
      %164 = vector.broadcast %163 : i1 to vector<2x128xi1>
      %165 = vector.broadcast %164 : vector<2x128xi1> to vector<2x128xi1>
      %166 = arith.xori %162, %165 : vector<2x128xi1>
      %167 = arith.andi %166, %160 : vector<2x128xi1>
      %168 = vector.broadcast %cst_50 : f32 to vector<2x128xf32>
      %169 = arith.addf %158, %168 : vector<2x128xf32>
      %170 = arith.select %167, %169, %158 : vector<2x128xi1>, vector<2x128xf32>
      %171 = vector.broadcast %10 : f32 to vector<2x128xf32>
      %172 = arith.addf %170, %171 : vector<2x128xf32>
      %cst_54 = arith.constant 1.000000e+00 : f32
      %173 = vector.broadcast %cst_54 : f32 to vector<2x128xf32>
      %174 = arith.remf %172, %173 : vector<2x128xf32>
      %cst_55 = arith.constant 0.000000e+00 : f32
      %175 = vector.broadcast %cst_55 : f32 to vector<2x128xf32>
      %176 = arith.cmpf one, %174, %175 : vector<2x128xf32>
      %cst_56 = arith.constant 0.000000e+00 : f32
      %177 = vector.broadcast %cst_56 : f32 to vector<2x128xf32>
      %178 = arith.cmpf olt, %174, %177 : vector<2x128xf32>
      %cst_57 = arith.constant 0.000000e+00 : f32
      %179 = arith.cmpf olt, %cst_54, %cst_57 : f32
      %180 = vector.broadcast %179 : i1 to vector<2x128xi1>
      %181 = vector.broadcast %180 : vector<2x128xi1> to vector<2x128xi1>
      %182 = arith.xori %178, %181 : vector<2x128xi1>
      %183 = arith.andi %182, %176 : vector<2x128xi1>
      %184 = vector.broadcast %cst_54 : f32 to vector<2x128xf32>
      %185 = arith.addf %174, %184 : vector<2x128xf32>
      %186 = arith.select %183, %185, %174 : vector<2x128xi1>, vector<2x128xf32>
      %cst_58 = arith.constant 6.000000e+00 : f32
      %187 = vector.broadcast %cst_58 : f32 to vector<2x128xf32>
      %188 = arith.mulf %186, %187 : vector<2x128xf32>
      %189 = math.floor %188 : vector<2x128xf32>
      %190 = arith.subf %188, %189 : vector<2x128xf32>
      %cst_59 = arith.constant 6.000000e+00 : f32
      %191 = vector.broadcast %cst_59 : f32 to vector<2x128xf32>
      %192 = arith.remf %189, %191 : vector<2x128xf32>
      %cst_60 = arith.constant 0.000000e+00 : f32
      %193 = vector.broadcast %cst_60 : f32 to vector<2x128xf32>
      %194 = arith.cmpf one, %192, %193 : vector<2x128xf32>
      %cst_61 = arith.constant 0.000000e+00 : f32
      %195 = vector.broadcast %cst_61 : f32 to vector<2x128xf32>
      %196 = arith.cmpf olt, %192, %195 : vector<2x128xf32>
      %cst_62 = arith.constant 0.000000e+00 : f32
      %197 = arith.cmpf olt, %cst_59, %cst_62 : f32
      %198 = vector.broadcast %197 : i1 to vector<2x128xi1>
      %199 = vector.broadcast %198 : vector<2x128xi1> to vector<2x128xi1>
      %200 = arith.xori %196, %199 : vector<2x128xi1>
      %201 = arith.andi %200, %194 : vector<2x128xi1>
      %202 = vector.broadcast %cst_59 : f32 to vector<2x128xf32>
      %203 = arith.addf %192, %202 : vector<2x128xf32>
      %204 = arith.select %201, %203, %192 : vector<2x128xi1>, vector<2x128xf32>
      %cst_63 = arith.constant 1.000000e+00 : f32
      %205 = vector.broadcast %cst_63 : f32 to vector<2x128xf32>
      %206 = arith.subf %205, %121 : vector<2x128xf32>
      %207 = arith.mulf %111, %206 : vector<2x128xf32>
      %208 = arith.mulf %121, %190 : vector<2x128xf32>
      %cst_64 = arith.constant 1.000000e+00 : f32
      %209 = vector.broadcast %cst_64 : f32 to vector<2x128xf32>
      %210 = arith.subf %209, %208 : vector<2x128xf32>
      %211 = arith.mulf %111, %210 : vector<2x128xf32>
      %cst_65 = arith.constant 1.000000e+00 : f32
      %212 = vector.broadcast %cst_65 : f32 to vector<2x128xf32>
      %213 = arith.subf %212, %190 : vector<2x128xf32>
      %214 = arith.mulf %121, %213 : vector<2x128xf32>
      %cst_66 = arith.constant 1.000000e+00 : f32
      %215 = vector.broadcast %cst_66 : f32 to vector<2x128xf32>
      %216 = arith.subf %215, %214 : vector<2x128xf32>
      %217 = arith.mulf %111, %216 : vector<2x128xf32>
      %cst_67 = arith.constant 0.000000e+00 : f32
      %218 = vector.broadcast %cst_67 : f32 to vector<2x128xf32>
      %219 = arith.cmpf oeq, %204, %218 : vector<2x128xf32>
      %cst_68 = arith.constant 1.000000e+00 : f32
      %220 = vector.broadcast %cst_68 : f32 to vector<2x128xf32>
      %221 = arith.cmpf oeq, %204, %220 : vector<2x128xf32>
      %cst_69 = arith.constant 2.000000e+00 : f32
      %222 = vector.broadcast %cst_69 : f32 to vector<2x128xf32>
      %223 = arith.cmpf oeq, %204, %222 : vector<2x128xf32>
      %cst_70 = arith.constant 3.000000e+00 : f32
      %224 = vector.broadcast %cst_70 : f32 to vector<2x128xf32>
      %225 = arith.cmpf oeq, %204, %224 : vector<2x128xf32>
      %cst_71 = arith.constant 4.000000e+00 : f32
      %226 = vector.broadcast %cst_71 : f32 to vector<2x128xf32>
      %227 = arith.cmpf oeq, %204, %226 : vector<2x128xf32>
      %228 = arith.select %227, %217, %111 : vector<2x128xi1>, vector<2x128xf32>
      %229 = arith.select %225, %207, %228 : vector<2x128xi1>, vector<2x128xf32>
      %230 = arith.select %223, %207, %229 : vector<2x128xi1>, vector<2x128xf32>
      %231 = arith.select %221, %211, %230 : vector<2x128xi1>, vector<2x128xf32>
      %232 = arith.select %219, %111, %231 : vector<2x128xi1>, vector<2x128xf32>
      %233 = arith.select %227, %207, %207 : vector<2x128xi1>, vector<2x128xf32>
      %234 = arith.select %225, %211, %233 : vector<2x128xi1>, vector<2x128xf32>
      %235 = arith.select %223, %111, %234 : vector<2x128xi1>, vector<2x128xf32>
      %236 = arith.select %221, %111, %235 : vector<2x128xi1>, vector<2x128xf32>
      %237 = arith.select %219, %217, %236 : vector<2x128xi1>, vector<2x128xf32>
      %238 = arith.select %227, %111, %211 : vector<2x128xi1>, vector<2x128xf32>
      %239 = arith.select %225, %111, %238 : vector<2x128xi1>, vector<2x128xf32>
      %240 = arith.select %223, %217, %239 : vector<2x128xi1>, vector<2x128xf32>
      %241 = arith.select %221, %207, %240 : vector<2x128xi1>, vector<2x128xf32>
      %242 = arith.select %219, %207, %241 : vector<2x128xi1>, vector<2x128xf32>
      %c0_72 = arith.constant 0 : index
      %c0_73 = arith.constant 0 : index
      %c0_74 = arith.constant 0 : index
      %c0_75 = arith.constant 0 : index
      %243 = vector.load %arg6[%c0_72, %c0_73, %c0_74, %c0_75] : memref<1x4x2x128xf32, #tpu.memory_space<vmem>>, vector<1x1x2x128xf32>
      %244 = vector.shape_cast %243 : vector<1x1x2x128xf32> to vector<2x128xf32>
      %245 = vector.shape_cast %232 : vector<2x128xf32> to vector<1x1x2x128xf32>
      tpu.vector_store %arg6[%c0_72, %c0_73, %c0_74, %c0_75], %245 {strides = array<i32>} : memref<1x4x2x128xf32, #tpu.memory_space<vmem>>, vector<1x1x2x128xf32>,
      %c0_76 = arith.constant 0 : index
      %c1_77 = arith.constant 1 : index
      %c0_78 = arith.constant 0 : index
      %c0_79 = arith.constant 0 : index
      %246 = vector.load %arg6[%c0_76, %c1_77, %c0_78, %c0_79] : memref<1x4x2x128xf32, #tpu.memory_space<vmem>>, vector<1x1x2x128xf32>
      %247 = vector.shape_cast %246 : vector<1x1x2x128xf32> to vector<2x128xf32>
      %248 = vector.shape_cast %237 : vector<2x128xf32> to vector<1x1x2x128xf32>
      tpu.vector_store %arg6[%c0_76, %c1_77, %c0_78, %c0_79], %248 {strides = array<i32>} : memref<1x4x2x128xf32, #tpu.memory_space<vmem>>, vector<1x1x2x128xf32>,
      %c0_80 = arith.constant 0 : index
      %c2_81 = arith.constant 2 : index
      %c0_82 = arith.constant 0 : index
      %c0_83 = arith.constant 0 : index
      %249 = vector.load %arg6[%c0_80, %c2_81, %c0_82, %c0_83] : memref<1x4x2x128xf32, #tpu.memory_space<vmem>>, vector<1x1x2x128xf32>
      %250 = vector.shape_cast %249 : vector<1x1x2x128xf32> to vector<2x128xf32>
      %251 = vector.shape_cast %242 : vector<2x128xf32> to vector<1x1x2x128xf32>
      tpu.vector_store %arg6[%c0_80, %c2_81, %c0_82, %c0_83], %251 {strides = array<i32>} : memref<1x4x2x128xf32, #tpu.memory_space<vmem>>, vector<1x1x2x128xf32>,
      %c0_84 = arith.constant 0 : index
      %c3_85 = arith.constant 3 : index
      %c0_86 = arith.constant 0 : index
      %c0_87 = arith.constant 0 : index
      %252 = vector.load %arg5[%c0_84, %c3_85, %c0_86, %c0_87] : memref<1x4x2x128xf32, #tpu.memory_space<vmem>>, vector<1x1x2x128xf32>
      %253 = vector.shape_cast %252 : vector<1x1x2x128xf32> to vector<2x128xf32>
      %c0_88 = arith.constant 0 : index
      %c3_89 = arith.constant 3 : index
      %c0_90 = arith.constant 0 : index
      %c0_91 = arith.constant 0 : index
      %254 = vector.load %arg6[%c0_88, %c3_89, %c0_90, %c0_91] : memref<1x4x2x128xf32, #tpu.memory_space<vmem>>, vector<1x1x2x128xf32>
      %255 = vector.shape_cast %254 : vector<1x1x2x128xf32> to vector<2x128xf32>
      %256 = vector.shape_cast %253 : vector<2x128xf32> to vector<1x1x2x128xf32>
      tpu.vector_store %arg6[%c0_88, %c3_89, %c0_90, %c0_91], %256 {strides = array<i32>} : memref<1x4x2x128xf32, #tpu.memory_space<vmem>>, vector<1x1x2x128xf32>,
    } else {
    }
    %true = arith.constant true
    %15 = arith.xori %2, %true : i1
    %16 = arith.extui %15 : i1 to i32
    %c0_i32_1 = arith.constant 0 : i32
    %17 = arith.cmpi ne, %16, %c0_i32_1 : i32
    scf.if %17 {
      %c0_2 = arith.constant 0 : index
      %c0_3 = arith.constant 0 : index
      %c0_4 = arith.constant 0 : index
      %c0_5 = arith.constant 0 : index
      %18 = vector.load %arg5[%c0_2, %c0_3, %c0_4, %c0_5] : memref<1x4x2x128xf32, #tpu.memory_space<vmem>>, vector<1x4x2x128xf32>
      %19 = vector.shape_cast %18 : vector<1x4x2x128xf32> to vector<4x2x128xf32>
      %c0_6 = arith.constant 0 : index
      %c0_7 = arith.constant 0 : index
      %c0_8 = arith.constant 0 : index
      %c0_9 = arith.constant 0 : index
      %20 = vector.load %arg6[%c0_6, %c0_7, %c0_8, %c0_9] : memref<1x4x2x128xf32, #tpu.memory_space<vmem>>, vector<1x4x2x128xf32>
      %21 = vector.shape_cast %20 : vector<1x4x2x128xf32> to vector<4x2x128xf32>
      %22 = vector.shape_cast %19 : vector<4x2x128xf32> to vector<1x4x2x128xf32>
      tpu.vector_store %arg6[%c0_6, %c0_7, %c0_8, %c0_9], %22 {strides = array<i32>} : memref<1x4x2x128xf32, #tpu.memory_space<vmem>>, vector<1x4x2x128xf32>,
    } else {
    }
    return
  }
  func.func @transform_0(%arg0: i32, %arg1: i32, %arg2: memref<2xi32, #tpu.memory_space<smem>>, %arg3: memref<2x4xf32, #tpu.memory_space<smem>>, %arg4: memref<2xf32, #tpu.memory_space<smem>>) -> (i32, i32, i32, i32) {
    %c0_i32 = arith.constant 0 : i32
    %c0_i32_0 = arith.constant 0 : i32
    %c0_i32_1 = arith.constant 0 : i32
    return %arg0, %c0_i32, %arg1, %c0_i32_0 : i32, i32, i32, i32
  }
  func.func @transform_1(%arg0: i32, %arg1: i32, %arg2: memref<2xi32, #tpu.memory_space<smem>>, %arg3: memref<2x4xf32, #tpu.memory_space<smem>>, %arg4: memref<2xf32, #tpu.memory_space<smem>>) -> (i32, i32, i32, i32) {
    %c0_i32 = arith.constant 0 : i32
    %c0_i32_0 = arith.constant 0 : i32
    %c0_i32_1 = arith.constant 0 : i32
    return %arg0, %c0_i32, %arg1, %c0_i32_0 : i32, i32, i32, i32
  }
}

module attributes {stable_mosaic.version = 11 : i64} {
  func.func @kernel(%arg0: i32, %arg1: memref<1xi32, #tpu.memory_space<smem>>, %arg2: memref<4x128xf32, #tpu.memory_space<vmem>>, %arg3: memref<4x128xf32, #tpu.memory_space<vmem>>) attributes {dimension_semantics = [#tpu.dimension_semantics<parallel>], iteration_bounds = array<i64: 1>, scalar_prefetch = 1 : i64, scratch_operands = 0 : i64, tpu.core_type = #tpu.core_type<tc>, window_params = [{transform_indices = @transform_0, window_bounds = array<i64: 4, 128>}, {transform_indices = @transform_1, window_bounds = array<i64: 4, 128>}]} {
    %0 = tpu.iota {dimensions = array<i32: 0>} : vector<4x128xi32>
    %1 = tpu.iota {dimensions = array<i32: 1>} : vector<4x128xi32>
    %c4_i32 = arith.constant 4 : i32
    %2 = arith.muli %arg0, %c4_i32 : i32
    %3 = vector.broadcast %2 : i32 to vector<4x128xi32>
    %4 = arith.addi %3, %0 : vector<4x128xi32>
    %c128_i32 = arith.constant 128 : i32
    %5 = vector.broadcast %c128_i32 : i32 to vector<4x128xi32>
    %6 = arith.muli %4, %5 : vector<4x128xi32>
    %7 = arith.addi %6, %1 : vector<4x128xi32>
    %c0 = arith.constant 0 : index
    %8 = memref.load %arg1[%c0] : memref<1xi32, #tpu.memory_space<smem>>
    %9 = vector.broadcast %8 : i32 to vector<4x128xi32>
    %10 = arith.xori %7, %9 : vector<4x128xi32>
    %c0_i32 = arith.constant 0 : i32
    %11 = vector.broadcast %c0_i32 : i32 to vector<4x128xi32>
    %c1759714724_i32 = arith.constant 1759714724 : i32
    %12 = vector.broadcast %c1759714724_i32 : i32 to vector<4x128xi32>
    %13 = arith.addi %10, %12 : vector<4x128xi32>
    %c16_i32 = arith.constant 16 : i32
    %14 = vector.broadcast %c16_i32 : i32 to vector<4x128xi32>
    %15 = arith.shrsi %13, %14 : vector<4x128xi32>
    %16 = arith.xori %13, %15 : vector<4x128xi32>
    %c73244475_i32 = arith.constant 73244475 : i32
    %17 = vector.broadcast %c73244475_i32 : i32 to vector<4x128xi32>
    %18 = arith.muli %16, %17 : vector<4x128xi32>
    %c15_i32 = arith.constant 15 : i32
    %19 = vector.broadcast %c15_i32 : i32 to vector<4x128xi32>
    %20 = arith.shrsi %18, %19 : vector<4x128xi32>
    %21 = arith.xori %18, %20 : vector<4x128xi32>
    %c739982445_i32 = arith.constant 739982445 : i32
    %22 = vector.broadcast %c739982445_i32 : i32 to vector<4x128xi32>
    %23 = arith.muli %21, %22 : vector<4x128xi32>
    %c16_i32_0 = arith.constant 16 : i32
    %24 = vector.broadcast %c16_i32_0 : i32 to vector<4x128xi32>
    %25 = arith.shrsi %23, %24 : vector<4x128xi32>
    %26 = arith.xori %23, %25 : vector<4x128xi32>
    %c7_i32 = arith.constant 7 : i32
    %27 = vector.broadcast %c7_i32 : i32 to vector<4x128xi32>
    %28 = arith.shrsi %26, %27 : vector<4x128xi32>
    %c16777215_i32 = arith.constant 16777215 : i32
    %29 = vector.broadcast %c16777215_i32 : i32 to vector<4x128xi32>
    %30 = arith.andi %28, %29 : vector<4x128xi32>
    %31 = arith.addi %11, %30 : vector<4x128xi32>
    %c-1691937715_i32 = arith.constant -1691937715 : i32
    %32 = vector.broadcast %c-1691937715_i32 : i32 to vector<4x128xi32>
    %33 = arith.addi %26, %32 : vector<4x128xi32>
    %c16_i32_1 = arith.constant 16 : i32
    %34 = vector.broadcast %c16_i32_1 : i32 to vector<4x128xi32>
    %35 = arith.shrsi %33, %34 : vector<4x128xi32>
    %36 = arith.xori %33, %35 : vector<4x128xi32>
    %c73244475_i32_2 = arith.constant 73244475 : i32
    %37 = vector.broadcast %c73244475_i32_2 : i32 to vector<4x128xi32>
    %38 = arith.muli %36, %37 : vector<4x128xi32>
    %c15_i32_3 = arith.constant 15 : i32
    %39 = vector.broadcast %c15_i32_3 : i32 to vector<4x128xi32>
    %40 = arith.shrsi %38, %39 : vector<4x128xi32>
    %41 = arith.xori %38, %40 : vector<4x128xi32>
    %c739982445_i32_4 = arith.constant 739982445 : i32
    %42 = vector.broadcast %c739982445_i32_4 : i32 to vector<4x128xi32>
    %43 = arith.muli %41, %42 : vector<4x128xi32>
    %c16_i32_5 = arith.constant 16 : i32
    %44 = vector.broadcast %c16_i32_5 : i32 to vector<4x128xi32>
    %45 = arith.shrsi %43, %44 : vector<4x128xi32>
    %46 = arith.xori %43, %45 : vector<4x128xi32>
    %c7_i32_6 = arith.constant 7 : i32
    %47 = vector.broadcast %c7_i32_6 : i32 to vector<4x128xi32>
    %48 = arith.shrsi %46, %47 : vector<4x128xi32>
    %c16777215_i32_7 = arith.constant 16777215 : i32
    %49 = vector.broadcast %c16777215_i32_7 : i32 to vector<4x128xi32>
    %50 = arith.andi %48, %49 : vector<4x128xi32>
    %51 = arith.addi %31, %50 : vector<4x128xi32>
    %c-848622858_i32 = arith.constant -848622858 : i32
    %52 = vector.broadcast %c-848622858_i32 : i32 to vector<4x128xi32>
    %53 = arith.addi %46, %52 : vector<4x128xi32>
    %c16_i32_8 = arith.constant 16 : i32
    %54 = vector.broadcast %c16_i32_8 : i32 to vector<4x128xi32>
    %55 = arith.shrsi %53, %54 : vector<4x128xi32>
    %56 = arith.xori %53, %55 : vector<4x128xi32>
    %c73244475_i32_9 = arith.constant 73244475 : i32
    %57 = vector.broadcast %c73244475_i32_9 : i32 to vector<4x128xi32>
    %58 = arith.muli %56, %57 : vector<4x128xi32>
    %c15_i32_10 = arith.constant 15 : i32
    %59 = vector.broadcast %c15_i32_10 : i32 to vector<4x128xi32>
    %60 = arith.shrsi %58, %59 : vector<4x128xi32>
    %61 = arith.xori %58, %60 : vector<4x128xi32>
    %c739982445_i32_11 = arith.constant 739982445 : i32
    %62 = vector.broadcast %c739982445_i32_11 : i32 to vector<4x128xi32>
    %63 = arith.muli %61, %62 : vector<4x128xi32>
    %c16_i32_12 = arith.constant 16 : i32
    %64 = vector.broadcast %c16_i32_12 : i32 to vector<4x128xi32>
    %65 = arith.shrsi %63, %64 : vector<4x128xi32>
    %66 = arith.xori %63, %65 : vector<4x128xi32>
    %c7_i32_13 = arith.constant 7 : i32
    %67 = vector.broadcast %c7_i32_13 : i32 to vector<4x128xi32>
    %68 = arith.shrsi %66, %67 : vector<4x128xi32>
    %c16777215_i32_14 = arith.constant 16777215 : i32
    %69 = vector.broadcast %c16777215_i32_14 : i32 to vector<4x128xi32>
    %70 = arith.andi %68, %69 : vector<4x128xi32>
    %71 = arith.addi %51, %70 : vector<4x128xi32>
    %c-5308001_i32 = arith.constant -5308001 : i32
    %72 = vector.broadcast %c-5308001_i32 : i32 to vector<4x128xi32>
    %73 = arith.addi %66, %72 : vector<4x128xi32>
    %c16_i32_15 = arith.constant 16 : i32
    %74 = vector.broadcast %c16_i32_15 : i32 to vector<4x128xi32>
    %75 = arith.shrsi %73, %74 : vector<4x128xi32>
    %76 = arith.xori %73, %75 : vector<4x128xi32>
    %c73244475_i32_16 = arith.constant 73244475 : i32
    %77 = vector.broadcast %c73244475_i32_16 : i32 to vector<4x128xi32>
    %78 = arith.muli %76, %77 : vector<4x128xi32>
    %c15_i32_17 = arith.constant 15 : i32
    %79 = vector.broadcast %c15_i32_17 : i32 to vector<4x128xi32>
    %80 = arith.shrsi %78, %79 : vector<4x128xi32>
    %81 = arith.xori %78, %80 : vector<4x128xi32>
    %c739982445_i32_18 = arith.constant 739982445 : i32
    %82 = vector.broadcast %c739982445_i32_18 : i32 to vector<4x128xi32>
    %83 = arith.muli %81, %82 : vector<4x128xi32>
    %c16_i32_19 = arith.constant 16 : i32
    %84 = vector.broadcast %c16_i32_19 : i32 to vector<4x128xi32>
    %85 = arith.shrsi %83, %84 : vector<4x128xi32>
    %86 = arith.xori %83, %85 : vector<4x128xi32>
    %c7_i32_20 = arith.constant 7 : i32
    %87 = vector.broadcast %c7_i32_20 : i32 to vector<4x128xi32>
    %88 = arith.shrsi %86, %87 : vector<4x128xi32>
    %c16777215_i32_21 = arith.constant 16777215 : i32
    %89 = vector.broadcast %c16777215_i32_21 : i32 to vector<4x128xi32>
    %90 = arith.andi %88, %89 : vector<4x128xi32>
    %91 = arith.addi %71, %90 : vector<4x128xi32>
    %c838006856_i32 = arith.constant 838006856 : i32
    %92 = vector.broadcast %c838006856_i32 : i32 to vector<4x128xi32>
    %93 = arith.addi %86, %92 : vector<4x128xi32>
    %c16_i32_22 = arith.constant 16 : i32
    %94 = vector.broadcast %c16_i32_22 : i32 to vector<4x128xi32>
    %95 = arith.shrsi %93, %94 : vector<4x128xi32>
    %96 = arith.xori %93, %95 : vector<4x128xi32>
    %c73244475_i32_23 = arith.constant 73244475 : i32
    %97 = vector.broadcast %c73244475_i32_23 : i32 to vector<4x128xi32>
    %98 = arith.muli %96, %97 : vector<4x128xi32>
    %c15_i32_24 = arith.constant 15 : i32
    %99 = vector.broadcast %c15_i32_24 : i32 to vector<4x128xi32>
    %100 = arith.shrsi %98, %99 : vector<4x128xi32>
    %101 = arith.xori %98, %100 : vector<4x128xi32>
    %c739982445_i32_25 = arith.constant 739982445 : i32
    %102 = vector.broadcast %c739982445_i32_25 : i32 to vector<4x128xi32>
    %103 = arith.muli %101, %102 : vector<4x128xi32>
    %c16_i32_26 = arith.constant 16 : i32
    %104 = vector.broadcast %c16_i32_26 : i32 to vector<4x128xi32>
    %105 = arith.shrsi %103, %104 : vector<4x128xi32>
    %106 = arith.xori %103, %105 : vector<4x128xi32>
    %c7_i32_27 = arith.constant 7 : i32
    %107 = vector.broadcast %c7_i32_27 : i32 to vector<4x128xi32>
    %108 = arith.shrsi %106, %107 : vector<4x128xi32>
    %c16777215_i32_28 = arith.constant 16777215 : i32
    %109 = vector.broadcast %c16777215_i32_28 : i32 to vector<4x128xi32>
    %110 = arith.andi %108, %109 : vector<4x128xi32>
    %111 = arith.addi %91, %110 : vector<4x128xi32>
    %c1681321713_i32 = arith.constant 1681321713 : i32
    %112 = vector.broadcast %c1681321713_i32 : i32 to vector<4x128xi32>
    %113 = arith.addi %106, %112 : vector<4x128xi32>
    %c16_i32_29 = arith.constant 16 : i32
    %114 = vector.broadcast %c16_i32_29 : i32 to vector<4x128xi32>
    %115 = arith.shrsi %113, %114 : vector<4x128xi32>
    %116 = arith.xori %113, %115 : vector<4x128xi32>
    %c73244475_i32_30 = arith.constant 73244475 : i32
    %117 = vector.broadcast %c73244475_i32_30 : i32 to vector<4x128xi32>
    %118 = arith.muli %116, %117 : vector<4x128xi32>
    %c15_i32_31 = arith.constant 15 : i32
    %119 = vector.broadcast %c15_i32_31 : i32 to vector<4x128xi32>
    %120 = arith.shrsi %118, %119 : vector<4x128xi32>
    %121 = arith.xori %118, %120 : vector<4x128xi32>
    %c739982445_i32_32 = arith.constant 739982445 : i32
    %122 = vector.broadcast %c739982445_i32_32 : i32 to vector<4x128xi32>
    %123 = arith.muli %121, %122 : vector<4x128xi32>
    %c16_i32_33 = arith.constant 16 : i32
    %124 = vector.broadcast %c16_i32_33 : i32 to vector<4x128xi32>
    %125 = arith.shrsi %123, %124 : vector<4x128xi32>
    %126 = arith.xori %123, %125 : vector<4x128xi32>
    %c7_i32_34 = arith.constant 7 : i32
    %127 = vector.broadcast %c7_i32_34 : i32 to vector<4x128xi32>
    %128 = arith.shrsi %126, %127 : vector<4x128xi32>
    %c16777215_i32_35 = arith.constant 16777215 : i32
    %129 = vector.broadcast %c16777215_i32_35 : i32 to vector<4x128xi32>
    %130 = arith.andi %128, %129 : vector<4x128xi32>
    %131 = arith.addi %111, %130 : vector<4x128xi32>
    %132 = arith.sitofp %131 : vector<4x128xi32> to vector<4x128xf32>
    %cst = arith.constant 8.42936942E-10 : f32
    %133 = vector.broadcast %cst : f32 to vector<4x128xf32>
    %134 = arith.mulf %132, %133 : vector<4x128xf32>
    %cst_36 = arith.constant 0.0424264073 : f32
    %135 = vector.broadcast %cst_36 : f32 to vector<4x128xf32>
    %136 = arith.subf %134, %135 : vector<4x128xf32>
    %c0_37 = arith.constant 0 : index
    %c0_38 = arith.constant 0 : index
    %137 = vector.load %arg2[%c0_37, %c0_38] : memref<4x128xf32, #tpu.memory_space<vmem>>, vector<4x128xf32>
    %138 = arith.addf %137, %136 : vector<4x128xf32>
    %cst_39 = arith.constant 0.000000e+00 : f32
    %cst_40 = arith.constant 1.000000e+00 : f32
    %139 = vector.broadcast %cst_39 : f32 to vector<4x128xf32>
    %140 = arith.maximumf %139, %138 : vector<4x128xf32>
    %141 = vector.broadcast %cst_40 : f32 to vector<4x128xf32>
    %142 = arith.minimumf %141, %140 : vector<4x128xf32>
    %c0_41 = arith.constant 0 : index
    %c0_42 = arith.constant 0 : index
    %143 = vector.load %arg3[%c0_41, %c0_42] : memref<4x128xf32, #tpu.memory_space<vmem>>, vector<4x128xf32>
    tpu.vector_store %arg3[%c0_41, %c0_42], %142 {strides = array<i32>} : memref<4x128xf32, #tpu.memory_space<vmem>>, vector<4x128xf32>,
    return
  }
  func.func @transform_0(%arg0: i32, %arg1: memref<1xi32, #tpu.memory_space<smem>>) -> (i32, i32) {
    %c0_i32 = arith.constant 0 : i32
    %c0_i32_0 = arith.constant 0 : i32
    return %arg0, %c0_i32 : i32, i32
  }
  func.func @transform_1(%arg0: i32, %arg1: memref<1xi32, #tpu.memory_space<smem>>) -> (i32, i32) {
    %c0_i32 = arith.constant 0 : i32
    %c0_i32_0 = arith.constant 0 : i32
    return %arg0, %c0_i32 : i32, i32
  }
}

</mosaic_0001>

<llo_original>
// kernel: branch_1_fun.1
$region0: #{branch_1_fun.1}
  #allocation0 [shape = 'u32[]', space=smem, size = 0x4, offset = 0x4, fixed_abs, tag = 'smem constant byte address 0x4 - core index']
  #allocation1 [shape = 'u32[144,128]{1,0:T(1,128)}', space=vmem, size = 0x12000, scoped, tag = 'internal scratch']
  #allocation2 [shape = 's32[1]{0}', space=sflag, size = 0x4, scoped, tag = 'scoped memory for branch_1_fun.1']
  #allocation3 [shape = 's32[1]{0:T(128)S(6)}', space=smem, size = 0x200, scoped, tag = 'prefetched SMEM operand 0']
  %s0 = inlined_call_operand.<no memory space> [shape: s32[1], index: 0, kind: input, shape index: {}]
  %s1 = inlined_call_operand.vmem [shape: f32[4,128], index: 1, kind: input, shape index: {}]
  %s2 = inlined_call_operand.vmem [shape: f32[4,128], index: 2, kind: output, shape index: {}]
  %s3 = sld [smem:[#allocation0]]
  $region14: #{branch_1_fun.1} parent=0
    _
  %s5 = ssub.s32 1, %s3
  %s6 = scalar_select 0, %s5, %s3
  %7 = sst [smem:[#allocation3]] %s0
  // Predicated region
  $region2: #{branch_1_fun.1} parent=0 // pred_check
    _
  $region3: #{branch_1_fun.1} parent=0 // pred_check_branch
    %9 = sbr.rel (0) target = $region5
  $region4: #{branch_1_fun.1} parent=0 // pred_region
    _
  $region5: #{branch_1_fun.1} parent=0 // pred_fallthru
    _
  %v10 = vlaneseq
  %v11 = vshrl.u32 %v10, 7
  %v12 = vlaneseq
  %v13 = vand.u32 %v12, 127
  %s14 = smul.u32 0, 4
  %v15 = vstv %s14
  %v16 = vadd.s32 %v15, %v11
  %v17 = vmul.u32 %v16, 128
  %v18 = vadd.s32 %v17, %v13
  %s19 = sld [smem:[#allocation3]]
  %v20 = vstv %s19
  %v21 = vxor.u32 %v18, %v20
  %v22 = vadd.s32 %v21, 1759714724
  %v23 = vshra.s32 %v22, 16
  %v24 = vxor.u32 %v22, %v23
  %v25 = vmul.u32 %v24, 73244475
  %v26 = vshra.s32 %v25, 15
  %v27 = vxor.u32 %v25, %v26
  %v28 = vmul.u32 %v27, 739982445
  %v29 = vshra.s32 %v28, 16
  %v30 = vxor.u32 %v28, %v29
  %v31 = vshra.s32 %v30, 7
  %v32 = vand.u32 %v31, 16777215
  %v33 = vadd.s32 %v30, 2603029581
  %v34 = vshra.s32 %v33, 16
  %v35 = vxor.u32 %v33, %v34
  %v36 = vmul.u32 %v35, 73244475
  %v37 = vshra.s32 %v36, 15
  %v38 = vxor.u32 %v36, %v37
  %v39 = vmul.u32 %v38, 739982445
  %v40 = vshra.s32 %v39, 16
  %v41 = vxor.u32 %v39, %v40
  %v42 = vshra.s32 %v41, 7
  %v43 = vand.u32 %v42, 16777215
  %v44 = vadd.s32 %v32, %v43
  %v45 = vadd.s32 %v41, 3446344438
  %v46 = vshra.s32 %v45, 16
  %v47 = vxor.u32 %v45, %v46
  %v48 = vmul.u32 %v47, 73244475
  %v49 = vshra.s32 %v48, 15
  %v50 = vxor.u32 %v48, %v49
  %v51 = vmul.u32 %v50, 739982445
  %v52 = vshra.s32 %v51, 16
  %v53 = vxor.u32 %v51, %v52
  %v54 = vshra.s32 %v53, 7
  %v55 = vand.u32 %v54, 16777215
  %v56 = vadd.s32 %v44, %v55
  %v57 = vadd.s32 %v53, 4289659295
  %v58 = vshra.s32 %v57, 16
  %v59 = vxor.u32 %v57, %v58
  %v60 = vmul.u32 %v59, 73244475
  %v61 = vshra.s32 %v60, 15
  %v62 = vxor.u32 %v60, %v61
  %v63 = vmul.u32 %v62, 739982445
  %v64 = vshra.s32 %v63, 16
  %v65 = vxor.u32 %v63, %v64
  %v66 = vshra.s32 %v65, 7
  %v67 = vand.u32 %v66, 16777215
  %v68 = vadd.s32 %v56, %v67
  %v69 = vadd.s32 %v65, 838006856
  %v70 = vshra.s32 %v69, 16
  %v71 = vxor.u32 %v69, %v70
  %v72 = vmul.u32 %v71, 73244475
  %v73 = vshra.s32 %v72, 15
  %v74 = vxor.u32 %v72, %v73
  %v75 = vmul.u32 %v74, 739982445
  %v76 = vshra.s32 %v75, 16
  %v77 = vxor.u32 %v75, %v76
  %v78 = vshra.s32 %v77, 7
  %v79 = vand.u32 %v78, 16777215
  %v80 = vadd.s32 %v68, %v79
  %v81 = vadd.s32 %v77, 1681321713
  %v82 = vshra.s32 %v81, 16
  %v83 = vxor.u32 %v81, %v82
  %v84 = vmul.u32 %v83, 73244475
  %v85 = vshra.s32 %v84, 15
  %v86 = vxor.u32 %v84, %v85
  %v87 = vmul.u32 %v86, 739982445
  %v88 = vshra.s32 %v87, 16
  %v89 = vxor.u32 %v87, %v88
  %v90 = vshra.s32 %v89, 7
  %v91 = vand.u32 %v90, 16777215
  %v92 = vadd.s32 %v80, %v91
  %v93 = vcvt.s32.f32 %v92
  %v94 = vmul.f32 %v93, 8.4293694e-10
  %v95 = vsub.f32 %v94, 0.042426407
  %v96 = vld [vmem:[%s1] sm:$0xf]
  %v97 = vadd.f32 %v96, %v95
  %v98 = vmax.f32 %v97, 0.0
  %v99 = vmin.f32 %v98, 1.0
  %100 = vst [vmem:[%s2] sm:$0xf] %v99
  // Predicated region
  $region6: #{branch_1_fun.1} parent=0 // pred_check
    _
  $region7: #{branch_1_fun.1} parent=0 // pred_check_branch
    %102 = sbr.rel (0) target = $region9
  $region8: #{branch_1_fun.1} parent=0 // pred_region
    _
  $region9: #{branch_1_fun.1} parent=0 // pred_fallthru
    _
  // Predicated region
  $region10: #{branch_1_fun.1} parent=0 // pred_check
    _
  $region11: #{branch_1_fun.1} parent=0 // pred_check_branch
    %104 = sbr.rel (0) target = $region13
  $region12: #{branch_1_fun.1} parent=0 // pred_region
    _
  $region13: #{branch_1_fun.1} parent=0 // pred_fallthru
    _

// kernel: multi_stream_augmentation.4
$region0: #{multi_stream_augmentation.4}
  #allocation0 [shape = 'u32[]', space=smem, size = 0x4, offset = 0x4, fixed_abs, tag = 'smem constant byte address 0x4 - core index']
  #allocation1 [shape = 'u32[144,128]{1,0:T(1,128)}', space=vmem, size = 0x12000, scoped, tag = 'internal scratch']
  #allocation2 [shape = 's32[1]{0}', space=sflag, size = 0x4, scoped, tag = 'scoped memory for multi_stream_augmentation.4']
  #allocation3 [shape = 'u8[1024]{0}', space=smem, size = 0x400, scoped, tag = 'prefetched SMEM operand 0']
  %s0 = inlined_call_operand.vmem [shape: f32[2,4], index: 0, kind: input, shape index: {}]
  %s1 = inlined_call_operand.vmem [shape: f32[2,4,2,128], index: 1, kind: input, shape index: {}]
  %s2 = inlined_call_operand.vmem [shape: f32[2,1,128], index: 2, kind: output, shape index: {}]
  %s3 = sld [smem:[#allocation0]]
  $region41: #{multi_stream_augmentation.4} parent=0
    _
  %s5 = ssub.s32 1, %s3
  %s6 = scalar_select 0, %s5, %s3
  %s7 = sshll.u32 %s0, 4
  %s8 = int_to_ptr.vmem [resolvable:$true] %s7
  %10 = dma.vmem_to_smem %s8, 32, [#allocation3], [#allocation2]
  %11 = dma.done [#allocation2], 32
  %12 = sfence
  loop: start=0, step=1, limit=4
  $region2: #{multi_stream_augmentation.4} parent=0 // loop_pre_header
    _
  $region3: #{multi_stream_augmentation.4} parent=0 // loop_header
    %s14 = sphi 0, %s18
    %p15 = scmp.ge.s32.totalorder %s14, 4
    %s21 = sphi 0, %s33
    %s22 = sphi 0, %s29
    %s23 = sphi 0, %s21
    %s24 = sphi 0, %s22
    %s25 = sphi 0, %s23
    %s26 = sphi 0, %s24
    %s38 = sphi 0, %s40
    %s41 = sphi 0, %s38
    %s42 = sphi 0, %s41
    %s58 = sphi 0, %s42
    %s64 = sphi 0, %s66
    %s67 = sphi 0, %s64
    %s68 = sphi 0, %s67
    %s84 = sphi 0, %s68
  $region4: #{multi_stream_augmentation.4} parent=0 // loop_header_branch
    %17 = sbr.rel (%p15) target = $region8
  $region5: #{multi_stream_augmentation.4} parent=0 // loop_body
    %s19 = ssub.s32 %s14, 1
    %s20 = ssub.s32 %s14, 2
    %s27 = sadd.s32 1, %s22
    %p28 = scmp.ge.s32.totalorder %s27, 1
    %s29 = scalar_select %p28, 0, %s27
    %s30 = sadd.s32 1, %s21
    %s31 = scalar_select %p28, %s30, %s21
    %p32 = scmp.ge.s32.totalorder %s31, 2
    %s33 = scalar_select %p32, 0, %s31
    %s34 = ssub.s32 %s21, %s33
    %s35 = ssub.s32 %s22, %s29
    %s36 = sor.u32 %s34, %s35
    %p37 = scmp.eq.s32.totalorder %s36, 0
    %s39 = sadd.s32 %s38, 1
    %s40 = scalar_select %p37, %s38, %s39
    %p43 = pneg %p37
    %p44 = scmp.eq.s32.totalorder %s14, 1
    %p45 = por %p43, %p44
    %p46 = scmp.ne.s32.totalorder %s38, %s41
    %p47 = scmp.eq.s32.totalorder %s14, 0
    %p48 = por %p46, %p47
    %p49 = scmp.ne.s32.totalorder %s38, %s41
    %p50 = scmp.eq.s32.totalorder %s19, 1
    %p51 = por %p49, %p50
    %p52 = scmp.ne.s32.totalorder %s41, %s42
    %p53 = scmp.eq.s32.totalorder %s19, 0
    %p54 = por %p52, %p53
    %p55 = scmp.ne.s32.totalorder %s41, %s42
    %p56 = scmp.eq.s32.totalorder %s20, 1
    %p57 = por %p55, %p56
    %p59 = scmp.ne.s32.totalorder %s42, %s58
    %p60 = scmp.eq.s32.totalorder %s20, 0
    %p61 = por %p59, %p60
    %s62 = ssub.s32 %s21, %s33
    %p63 = scmp.eq.s32.totalorder %s62, 0
    %s65 = sadd.s32 %s64, 1
    %s66 = scalar_select %p63, %s64, %s65
    %p69 = pneg %p63
    %p70 = scmp.eq.s32.totalorder %s14, 1
    %p71 = por %p69, %p70
    %p72 = scmp.ne.s32.totalorder %s64, %s67
    %p73 = scmp.eq.s32.totalorder %s14, 0
    %p74 = por %p72, %p73
    %p75 = scmp.ne.s32.totalorder %s64, %s67
    %p76 = scmp.eq.s32.totalorder %s19, 1
    %p77 = por %p75, %p76
    %p78 = scmp.ne.s32.totalorder %s67, %s68
    %p79 = scmp.eq.s32.totalorder %s19, 0
    %p80 = por %p78, %p79
    %p81 = scmp.ne.s32.totalorder %s67, %s68
    %p82 = scmp.eq.s32.totalorder %s20, 1
    %p83 = por %p81, %p82
    %p85 = scmp.ne.s32.totalorder %s68, %s84
    %p86 = scmp.eq.s32.totalorder %s20, 0
    %p87 = por %p85, %p86
    %p88 = scmp.le.s32.totalorder 1, %s14
    %p89 = scmp.lt.s32.totalorder %s14, 3
    %p90 = pnand %p88, %p89
    %p91 = pneg %p90
    // Predicated region
    $region9: #{multi_stream_augmentation.4} parent=5 // pred_check
      _
    $region10: #{multi_stream_augmentation.4} parent=5 // pred_check_branch
      %93 = sbr.rel (%p90) target = $region12
    $region11: #{multi_stream_augmentation.4} parent=5 // pred_region
      %s94 = ssub.s32 %s14, 1
    $region12: #{multi_stream_augmentation.4} parent=5 // pred_fallthru
      _
    %p95 = scmp.lt.s32.totalorder %s14, 2
    // Predicated region
    $region13: #{multi_stream_augmentation.4} parent=5 // pred_check
      %p96 = pneg %p95
    $region14: #{multi_stream_augmentation.4} parent=5 // pred_check_branch
      %98 = sbr.rel (%p96) target = $region16
    $region15: #{multi_stream_augmentation.4} parent=5 // pred_region
      // Predicated region
      $region17: #{multi_stream_augmentation.4} parent=15 // pred_check
        %p99 = pneg %p48
      $region18: #{multi_stream_augmentation.4} parent=15 // pred_check_branch
        %101 = sbr.rel (%p99) target = $region20
      $region19: #{multi_stream_augmentation.4} parent=15 // pred_region
        %p102 = scmp.lt.s32.totalorder %s21, 1
        %s103 = scalar_select %p102, %s21, 1
        %p104 = scmp.lt.s32.totalorder %s22, 0
        %s105 = scalar_select %p104, %s22, 0
        %s106 = smul.addr %s103, 4
        %s107 = sadd.s32 %s105, %s106
        %s108 = smul.addr %s107, 2
        %s109 = scalar_lea.vmem %s1, %s108
      $region20: #{multi_stream_augmentation.4} parent=15 // pred_fallthru
        _
    $region16: #{multi_stream_augmentation.4} parent=5 // pred_fallthru
      _
    %p110 = scmp.le.s32.totalorder 1, %s14
    %p111 = scmp.lt.s32.totalorder %s14, 3
    %p112 = pnand %p110, %p111
    %p113 = pneg %p112
    // Predicated region
    $region21: #{multi_stream_augmentation.4} parent=5 // pred_check
      _
    $region22: #{multi_stream_augmentation.4} parent=5 // pred_check_branch
      %115 = sbr.rel (%p112) target = $region24
    $region23: #{multi_stream_augmentation.4} parent=5 // pred_region
      %s116 = ssub.s32 %s14, 1
      %p117 = scmp.lt.s32.totalorder %s23, 1
      %s118 = scalar_select %p117, %s23, 1
      %p119 = scmp.lt.s32.totalorder %s24, 0
      %s120 = scalar_select %p119, %s24, 0
      %s121 = smul.addr %s118, 4
      %s122 = sadd.s32 %s120, %s121
      %s123 = smul.addr %s122, 2
      %s124 = scalar_lea.vmem %s1, %s123
      %p125 = pneg %p54
      %p126 = pneg %p51
      %p127 = pneg %p80
      %p128 = pneg %p77
      %p129 = scmp.lt.s32.totalorder %s23, 1
      %s130 = scalar_select %p129, %s23, 1
      %s131 = scalar_lea.vmem %s2, %s130
      %p132 = scmp.lt.s32.totalorder %s23, 1
      %s133 = scalar_select %p132, %s23, 1
      %p134 = scmp.lt.s32.totalorder %s24, 0
      %s135 = scalar_select %p134, %s24, 0
      %s136 = smul.addr %s133, 4
      %s137 = sadd.s32 %s135, %s136
      %s138 = smul.addr %s137, 2
      %s139 = scalar_lea.vmem %s1, %s138
      %p140 = scmp.lt.s32.totalorder %s23, 1
      %s141 = scalar_select %p140, %s23, 1
      %s142 = scalar_lea.vmem %s2, %s141
      %s143 = smul.u32 %s23, 128
      %s144 = sld [smem:[#allocation3 + %s143]]
      %v145 = vld [vmem:[%s139] sm:$0x3]
      %v146 = vstv %s144
      %v147 = vmul.f32 %v145, %v146
      %v148 = vmax.f32 %v147, 0.0
      %v149 = vmin.f32 %v148, 1.0
      %s150 = scalar_lea.vmem %s139, 2
      %v151 = vld [vmem:[%s150] sm:$0x3]
      %v152 = vmul.f32 %v151, %v146
      %v153 = vmax.f32 %v152, 0.0
      %v154 = vmin.f32 %v153, 1.0
      %s155 = scalar_lea.vmem %s139, 4
      %v156 = vld [vmem:[%s155] sm:$0x3]
      %v157 = vmul.f32 %v156, %v146
      %v158 = vmax.f32 %v157, 0.0
      %v159 = vmin.f32 %v158, 1.0
      %v160 = vmul.f32 %v149, 0.2989
      %v161 = vmul.f32 %v154, 0.587
      %v162 = vadd.f32 %v160, %v161
      %v163 = vmul.f32 %v159, 0.114
      %v164 = vadd.f32 %v162, %v163
      %vm165 = vcmask 1041408
      %v166 = vsel %vm165, %v164, 0.0
      %v167 = vrot.slane %v166, 4
      %v168 = vadd.f32 %v166, %v167
      %v169 = vrot.slane %v168, 2
      %v170 = vadd.f32 %v168, %v169
      %v171 = vrot.slane %v170, 1
      %v172 = vadd.f32 %v170, %v171
      %p173 = scmp.eq.s32.totalorder %s24, 0
      // Predicated region
      $region25: #{multi_stream_augmentation.4} parent=23 // pred_check
        %p174 = pneg %p173
      $region26: #{multi_stream_augmentation.4} parent=23 // pred_check_branch
        %176 = sbr.rel (%p174) target = $region28
      $region27: #{multi_stream_augmentation.4} parent=23 // pred_region
        %177 = vst [vmem:[%s142] sm:$0x1] 0.0
      $region28: #{multi_stream_augmentation.4} parent=23 // pred_fallthru
        _
      %v178 = vld [vmem:[%s142] sm:$0x1]
      %v179 = vadd.f32 %v178, %v172
      %180 = vst [vmem:[%s142] sm:$0x1] %v179
      %p181 = scmp.lt.s32.totalorder %s23, 1
      %s182 = scalar_select %p181, %s23, 1
      %s183 = scalar_lea.vmem %s2, %s182
      // Predicated region
      $region29: #{multi_stream_augmentation.4} parent=23 // pred_check
        %p184 = pneg %p77
      $region30: #{multi_stream_augmentation.4} parent=23 // pred_check_branch
        %186 = sbr.rel (%p184) target = $region32
      $region31: #{multi_stream_augmentation.4} parent=23 // pred_region
        _
      $region32: #{multi_stream_augmentation.4} parent=23 // pred_fallthru
        _
    $region24: #{multi_stream_augmentation.4} parent=5 // pred_fallthru
      _
    %p187 = scmp.le.s32.totalorder 2, %s14
    // Predicated region
    $region33: #{multi_stream_augmentation.4} parent=5 // pred_check
      %p188 = pneg %p187
    $region34: #{multi_stream_augmentation.4} parent=5 // pred_check_branch
      %190 = sbr.rel (%p188) target = $region36
    $region35: #{multi_stream_augmentation.4} parent=5 // pred_region
      %s191 = ssub.s32 %s14, 2
      // Predicated region
      $region37: #{multi_stream_augmentation.4} parent=35 // pred_check
        %p192 = pneg %p83
      $region38: #{multi_stream_augmentation.4} parent=35 // pred_check_branch
        %194 = sbr.rel (%p192) target = $region40
      $region39: #{multi_stream_augmentation.4} parent=35 // pred_region
        %p195 = scmp.lt.s32.totalorder %s25, 1
        %s196 = scalar_select %p195, %s25, 1
        %s197 = scalar_lea.vmem %s2, %s196
      $region40: #{multi_stream_augmentation.4} parent=35 // pred_fallthru
        _
    $region36: #{multi_stream_augmentation.4} parent=5 // pred_fallthru
      _
  $region6: #{multi_stream_augmentation.4} parent=0 // loop_footer
    %s18 = sadd.s32 1, %s14
  $region7: #{multi_stream_augmentation.4} parent=0 // loop_footer_branch
    %13 = sbr.rel target = $region3
  $region8: #{multi_stream_augmentation.4} parent=0 // loop_exit
    _

// kernel: multi_stream_augmentation.5
$region0: #{multi_stream_augmentation.5}
  #allocation0 [shape = 'u32[]', space=smem, size = 0x4, offset = 0x4, fixed_abs, tag = 'smem constant byte address 0x4 - core index']
  #allocation1 [shape = 'u32[144,128]{1,0:T(1,128)}', space=vmem, size = 0x12000, scoped, tag = 'internal scratch']
  #allocation2 [shape = 's32[1]{0}', space=sflag, size = 0x4, scoped, tag = 'scoped memory for multi_stream_augmentation.5']
  #allocation3 [shape = 'u8[512]{0}', space=smem, size = 0x200, scoped, tag = 'prefetched SMEM operand 0']
  #allocation4 [shape = 'u8[1024]{0}', space=smem, size = 0x400, scoped, tag = 'prefetched SMEM operand 1']
  #allocation5 [shape = 'u8[512]{0}', space=smem, size = 0x200, scoped, tag = 'prefetched SMEM operand 2']
  %s0 = inlined_call_operand.vmem [shape: s32[2], index: 0, kind: input, shape index: {}]
  %s1 = inlined_call_operand.vmem [shape: f32[2,4], index: 1, kind: input, shape index: {}]
  %s2 = inlined_call_operand.vmem [shape: f32[2], index: 2, kind: input, shape index: {}]
  %s3 = inlined_call_operand.vmem [shape: f32[2,4,2,128], index: 3, kind: input, shape index: {}]
  %s4 = inlined_call_operand.vmem [shape: f32[2,4,2,128], index: 4, kind: output, shape index: {}]
  %s5 = sld [smem:[#allocation0]]
  $region45: #{multi_stream_augmentation.5} parent=0
    _
  %s7 = ssub.s32 1, %s5
  %s8 = scalar_select 0, %s7, %s5
  %s9 = sshll.u32 %s0, 4
  %s10 = int_to_ptr.vmem [resolvable:$true] %s9
  %12 = dma.vmem_to_smem %s10, 16, [#allocation3], [#allocation2]
  %s13 = sshll.u32 %s1, 4
  %s14 = int_to_ptr.vmem [resolvable:$true] %s13
  %16 = dma.vmem_to_smem %s14, 32, [#allocation4], [#allocation2]
  %s17 = sshll.u32 %s2, 4
  %s18 = int_to_ptr.vmem [resolvable:$true] %s17
  %20 = dma.vmem_to_smem %s18, 16, [#allocation5], [#allocation2]
  %21 = dma.done [#allocation2], 64
  %22 = sfence
  loop: start=0, step=1, limit=4
  $region2: #{multi_stream_augmentation.5} parent=0 // loop_pre_header
    _
  $region3: #{multi_stream_augmentation.5} parent=0 // loop_header
    %s24 = sphi 0, %s28
    %p25 = scmp.ge.s32.totalorder %s24, 4
    %s31 = sphi 0, %s43
    %s32 = sphi 0, %s39
    %s33 = sphi 0, %s31
    %s34 = sphi 0, %s32
    %s35 = sphi 0, %s33
    %s36 = sphi 0, %s34
    %s48 = sphi 0, %s50
    %s51 = sphi 0, %s48
    %s52 = sphi 0, %s51
    %s68 = sphi 0, %s52
    %s76 = sphi 0, %s78
    %s79 = sphi 0, %s76
    %s80 = sphi 0, %s79
    %s96 = sphi 0, %s80
  $region4: #{multi_stream_augmentation.5} parent=0 // loop_header_branch
    %27 = sbr.rel (%p25) target = $region8
  $region5: #{multi_stream_augmentation.5} parent=0 // loop_body
    %s29 = ssub.s32 %s24, 1
    %s30 = ssub.s32 %s24, 2
    %s37 = sadd.s32 1, %s32
    %p38 = scmp.ge.s32.totalorder %s37, 1
    %s39 = scalar_select %p38, 0, %s37
    %s40 = sadd.s32 1, %s31
    %s41 = scalar_select %p38, %s40, %s31
    %p42 = scmp.ge.s32.totalorder %s41, 2
    %s43 = scalar_select %p42, 0, %s41
    %s44 = ssub.s32 %s31, %s43
    %s45 = ssub.s32 %s32, %s39
    %s46 = sor.u32 %s44, %s45
    %p47 = scmp.eq.s32.totalorder %s46, 0
    %s49 = sadd.s32 %s48, 1
    %s50 = scalar_select %p47, %s48, %s49
    %p53 = pneg %p47
    %p54 = scmp.eq.s32.totalorder %s24, 1
    %p55 = por %p53, %p54
    %p56 = scmp.ne.s32.totalorder %s48, %s51
    %p57 = scmp.eq.s32.totalorder %s24, 0
    %p58 = por %p56, %p57
    %p59 = scmp.ne.s32.totalorder %s48, %s51
    %p60 = scmp.eq.s32.totalorder %s29, 1
    %p61 = por %p59, %p60
    %p62 = scmp.ne.s32.totalorder %s51, %s52
    %p63 = scmp.eq.s32.totalorder %s29, 0
    %p64 = por %p62, %p63
    %p65 = scmp.ne.s32.totalorder %s51, %s52
    %p66 = scmp.eq.s32.totalorder %s30, 1
    %p67 = por %p65, %p66
    %p69 = scmp.ne.s32.totalorder %s52, %s68
    %p70 = scmp.eq.s32.totalorder %s30, 0
    %p71 = por %p69, %p70
    %s72 = ssub.s32 %s31, %s43
    %s73 = ssub.s32 %s32, %s39
    %s74 = sor.u32 %s72, %s73
    %p75 = scmp.eq.s32.totalorder %s74, 0
    %s77 = sadd.s32 %s76, 1
    %s78 = scalar_select %p75, %s76, %s77
    %p81 = pneg %p75
    %p82 = scmp.eq.s32.totalorder %s24, 1
    %p83 = por %p81, %p82
    %p84 = scmp.ne.s32.totalorder %s76, %s79
    %p85 = scmp.eq.s32.totalorder %s24, 0
    %p86 = por %p84, %p85
    %p87 = scmp.ne.s32.totalorder %s76, %s79
    %p88 = scmp.eq.s32.totalorder %s29, 1
    %p89 = por %p87, %p88
    %p90 = scmp.ne.s32.totalorder %s79, %s80
    %p91 = scmp.eq.s32.totalorder %s29, 0
    %p92 = por %p90, %p91
    %p93 = scmp.ne.s32.totalorder %s79, %s80
    %p94 = scmp.eq.s32.totalorder %s30, 1
    %p95 = por %p93, %p94
    %p97 = scmp.ne.s32.totalorder %s80, %s96
    %p98 = scmp.eq.s32.totalorder %s30, 0
    %p99 = por %p97, %p98
    %p100 = scmp.le.s32.totalorder 1, %s24
    %p101 = scmp.lt.s32.totalorder %s24, 3
    %p102 = pnand %p100, %p101
    %p103 = pneg %p102
    // Predicated region
    $region9: #{multi_stream_augmentation.5} parent=5 // pred_check
      _
    $region10: #{multi_stream_augmentation.5} parent=5 // pred_check_branch
      %105 = sbr.rel (%p102) target = $region12
    $region11: #{multi_stream_augmentation.5} parent=5 // pred_region
      %s106 = ssub.s32 %s24, 1
    $region12: #{multi_stream_augmentation.5} parent=5 // pred_fallthru
      _
    %p107 = scmp.lt.s32.totalorder %s24, 2
    // Predicated region
    $region13: #{multi_stream_augmentation.5} parent=5 // pred_check
      %p108 = pneg %p107
    $region14: #{multi_stream_augmentation.5} parent=5 // pred_check_branch
      %110 = sbr.rel (%p108) target = $region16
    $region15: #{multi_stream_augmentation.5} parent=5 // pred_region
      // Predicated region
      $region17: #{multi_stream_augmentation.5} parent=15 // pred_check
        %p111 = pneg %p58
      $region18: #{multi_stream_augmentation.5} parent=15 // pred_check_branch
        %113 = sbr.rel (%p111) target = $region20
      $region19: #{multi_stream_augmentation.5} parent=15 // pred_region
        %p114 = scmp.lt.s32.totalorder %s31, 1
        %s115 = scalar_select %p114, %s31, 1
        %p116 = scmp.lt.s32.totalorder %s32, 0
        %s117 = scalar_select %p116, %s32, 0
        %s118 = smul.addr %s115, 4
        %s119 = sadd.s32 %s117, %s118
        %s120 = smul.addr %s119, 2
        %s121 = scalar_lea.vmem %s3, %s120
      $region20: #{multi_stream_augmentation.5} parent=15 // pred_fallthru
        _
    $region16: #{multi_stream_augmentation.5} parent=5 // pred_fallthru
      _
    %p122 = scmp.le.s32.totalorder 1, %s24
    %p123 = scmp.lt.s32.totalorder %s24, 3
    %p124 = pnand %p122, %p123
    %p125 = pneg %p124
    // Predicated region
    $region21: #{multi_stream_augmentation.5} parent=5 // pred_check
      _
    $region22: #{multi_stream_augmentation.5} parent=5 // pred_check_branch
      %127 = sbr.rel (%p124) target = $region24
    $region23: #{multi_stream_augmentation.5} parent=5 // pred_region
      %s128 = ssub.s32 %s24, 1
      %p129 = scmp.lt.s32.totalorder %s33, 1
      %s130 = scalar_select %p129, %s33, 1
      %p131 = scmp.lt.s32.totalorder %s34, 0
      %s132 = scalar_select %p131, %s34, 0
      %s133 = smul.addr %s130, 4
      %s134 = sadd.s32 %s132, %s133
      %s135 = smul.addr %s134, 2
      %s136 = scalar_lea.vmem %s3, %s135
      %p137 = pneg %p64
      %p138 = pneg %p61
      %p139 = pneg %p92
      %p140 = pneg %p89
      %p141 = scmp.lt.s32.totalorder %s33, 1
      %s142 = scalar_select %p141, %s33, 1
      %p143 = scmp.lt.s32.totalorder %s34, 0
      %s144 = scalar_select %p143, %s34, 0
      %s145 = smul.addr %s142, 4
      %s146 = sadd.s32 %s144, %s145
      %s147 = smul.addr %s146, 2
      %s148 = scalar_lea.vmem %s4, %s147
      %p149 = scmp.lt.s32.totalorder %s33, 1
      %s150 = scalar_select %p149, %s33, 1
      %p151 = scmp.lt.s32.totalorder %s34, 0
      %s152 = scalar_select %p151, %s34, 0
      %s153 = smul.addr %s150, 4
      %s154 = sadd.s32 %s152, %s153
      %s155 = smul.addr %s154, 2
      %s156 = scalar_lea.vmem %s3, %s155
      %p157 = scmp.lt.s32.totalorder %s33, 1
      %s158 = scalar_select %p157, %s33, 1
      %p159 = scmp.lt.s32.totalorder %s34, 0
      %s160 = scalar_select %p159, %s34, 0
      %s161 = smul.addr %s158, 4
      %s162 = sadd.s32 %s160, %s161
      %s163 = smul.addr %s162, 2
      %s164 = scalar_lea.vmem %s4, %s163
      %s165 = sld [smem:[#allocation3 + %s33]]
      %p166 = scmp.gt.s32.totalorder %s165, 0
      %s167 = smul.u32 %s33, 128
      %s168 = sld [smem:[#allocation4 + %s167]]
      %s169 = sadd.s32 %s167, 1
      %s170 = sld [smem:[#allocation4 + %s169]]
      %s171 = sadd.s32 %s167, 2
      %s172 = sld [smem:[#allocation4 + %s171]]
      %s173 = sadd.s32 %s167, 3
      %s174 = sld [smem:[#allocation4 + %s173]]
      %s175 = sld [smem:[#allocation5 + %s33]]
      // Predicated region
      $region25: #{multi_stream_augmentation.5} parent=23 // pred_check
        %p176 = pneg %p166
      $region26: #{multi_stream_augmentation.5} parent=23 // pred_check_branch
        %178 = sbr.rel (%p176) target = $region28
      $region27: #{multi_stream_augmentation.5} parent=23 // pred_region
        %v179 = vld [vmem:[%s156] sm:$0x3]
        %s180 = scalar_lea.vmem %s156, 2
        %v181 = vld [vmem:[%s180] sm:$0x3]
        %s182 = scalar_lea.vmem %s156, 4
        %v183 = vld [vmem:[%s182] sm:$0x3]
        %v184 = vstv %s168
        %v185 = vmul.f32 %v179, %v184
        %v186 = vmax.f32 %v185, 0.0
        %v187 = vmin.f32 %v186, 1.0
        %v188 = vmul.f32 %v181, %v184
        %v189 = vmax.f32 %v188, 0.0
        %v190 = vmin.f32 %v189, 1.0
        %v191 = vmul.f32 %v183, %v184
        %v192 = vmax.f32 %v191, 0.0
        %v193 = vmin.f32 %v192, 1.0
        %v194 = vstv %s170
        %v195 = vmul.f32 %v194, %v187
        %s196 = ssub.f32 1.0, %s170
        %s197 = smul.f32 %s196, %s175
        %v198 = vstv %s197
        %v199 = vadd.f32 %v195, %v198
        %v200 = vmax.f32 %v199, 0.0
        %v201 = vmin.f32 %v200, 1.0
        %v202 = vmul.f32 %v194, %v190
        %v203 = vadd.f32 %v202, %v198
        %v204 = vmax.f32 %v203, 0.0
        %v205 = vmin.f32 %v204, 1.0
        %v206 = vmul.f32 %v194, %v193
        %v207 = vadd.f32 %v206, %v198
        %v208 = vmax.f32 %v207, 0.0
        %v209 = vmin.f32 %v208, 1.0
        %v210 = vmul.f32 %v201, 0.2989
        %v211 = vmul.f32 %v205, 0.587
        %v212 = vadd.f32 %v210, %v211
        %v213 = vmul.f32 %v209, 0.114
        %v214 = vadd.f32 %v212, %v213
        %v215 = vstv %s172
        %v216 = vmul.f32 %v215, %v201
        %s217 = ssub.f32 1.0, %s172
        %v218 = vstv %s217
        %v219 = vmul.f32 %v218, %v214
        %v220 = vadd.f32 %v216, %v219
        %v221 = vmax.f32 %v220, 0.0
        %v222 = vmin.f32 %v221, 1.0
        %v223 = vmul.f32 %v215, %v205
        %v224 = vadd.f32 %v223, %v219
        %v225 = vmax.f32 %v224, 0.0
        %v226 = vmin.f32 %v225, 1.0
        %v227 = vmul.f32 %v215, %v209
        %v228 = vadd.f32 %v227, %v219
        %v229 = vmax.f32 %v228, 0.0
        %v230 = vmin.f32 %v229, 1.0
        %v231 = vmax.f32 %v222, %v226
        %v232 = vmax.f32 %v231, %v230
        %v233 = vmin.f32 %v222, %v226
        %v234 = vmin.f32 %v233, %v230
        %vm235 = vcmp.eq.f32.partialorder %v232, %v234
        %v236 = vsub.f32 %v232, %v234
        %v237 = vsel %vm235, 1.0, %v232
        %v238 = vrcp.pop %v237
        %v239 = vmul.f32 %v236, %v238
        %v240 = vmin.f32 %v239, 1.0
        %v241 = vsel %vm235, 1.0, %v236
        %v242 = vrcp.pop %v241
        %v243 = vmul.f32 1.0, %v242
        %v244 = vsub.f32 %v232, %v222
        %v245 = vmul.f32 %v244, %v243
        %v246 = vsub.f32 %v232, %v226
        %v247 = vmul.f32 %v246, %v243
        %v248 = vsub.f32 %v232, %v230
        %v249 = vmul.f32 %v248, %v243
        %vm250 = vcmp.eq.f32.partialorder %v232, %v222
        %v251 = vsub.f32 %v249, %v247
        %v252 = vsel %vm250, %v251, 0.0
        %vm253 = vcmp.eq.f32.partialorder %v232, %v226
        %vm254 = vcmp.ne.f32.partialorder %v232, %v222
        %vm255 = vmand %vm253, %vm254
        %v256 = vadd.f32 %v245, 2.0
        %v257 = vsub.f32 %v256, %v249
        %v258 = vsel %vm255, %v257, 0.0
        %vm259 = vcmp.ne.f32.partialorder %v232, %v226
        %vm260 = vmand %vm259, %vm254
        %v261 = vadd.f32 %v247, 4.0
        %v262 = vsub.f32 %v261, %v245
        %v263 = vsel %vm260, %v262, 0.0
        %v264 = vadd.f32 %v252, %v258
        %v265 = vadd.f32 %v264, %v263
        %v266 = vmul.f32 %v265, 0.16666667
        %v267 = vadd.f32 %v266, 1.0
        %v268 = vand.u32 2147483647, %v267
        %v269 = vrcp.pop 1.0
        %v270 = vmul.f32 %v268, %v269
        %v271 = vfloor.f32 %v270
        %v272 = vsub.f32 %v268, %v271
        %vm273 = vcmp.eq.f32.partialorder %v272, 1.0
        %v274 = vsel %vm273, 0.0, %v272
        %v275 = vand.u32 2147483647, %v274
        %v276 = vand.u32 %v267, 2147483648
        %v277 = vor.u32 %v275, %v276
        %vm278 = vcmp.ne.f32.partialorder %v277, 0.0
        %vm279 = vcmp.lt.f32.partialorder %v277, 0.0
        %vm280 = vmand %vm279, %vm278
        %v281 = vadd.f32 %v277, 1.0
        %v282 = vsel %vm280, %v281, %v277
        %v283 = vstv %s174
        %v284 = vadd.f32 %v282, %v283
        %v285 = vand.u32 2147483647, %v284
        %v286 = vrcp.pop 1.0
        %v287 = vmul.f32 %v285, %v286
        %v288 = vfloor.f32 %v287
        %v289 = vsub.f32 %v285, %v288
        %vm290 = vcmp.eq.f32.partialorder %v289, 1.0
        %v291 = vsel %vm290, 0.0, %v289
        %v292 = vand.u32 2147483647, %v291
        %v293 = vand.u32 %v284, 2147483648
        %v294 = vor.u32 %v292, %v293
        %vm295 = vcmp.ne.f32.partialorder %v294, 0.0
        %vm296 = vcmp.lt.f32.partialorder %v294, 0.0
        %vm297 = vmand %vm296, %vm295
        %v298 = vadd.f32 %v294, 1.0
        %v299 = vsel %vm297, %v298, %v294
        %v300 = vmul.f32 %v299, 6.0
        %v301 = vfloor.f32 %v300
        %v302 = vsub.f32 %v300, %v301
        %v303 = vand.u32 2147483647, %v301
        %v304 = vrcp.pop 6.0
        %v305 = vmul.f32 %v303, %v304
        %v306 = vfloor.f32 %v305
        %v307 = vmul.f32 %v306, 6.0
        %v308 = vsub.f32 %v303, %v307
        %vm309 = vcmp.eq.f32.partialorder %v308, 6.0
        %v310 = vsel %vm309, 0.0, %v308
        %v311 = vand.u32 2147483647, %v310
        %v312 = vand.u32 %v301, 2147483648
        %v313 = vor.u32 %v311, %v312
        %vm314 = vcmp.ne.f32.partialorder %v313, 0.0
        %vm315 = vcmp.lt.f32.partialorder %v313, 0.0
        %vm316 = vmand %vm315, %vm314
        %v317 = vadd.f32 %v313, 6.0
        %v318 = vsel %vm316, %v317, %v313
        %v319 = vsub.f32 1.0, %v240
        %v320 = vmul.f32 %v232, %v319
        %v321 = vmul.f32 %v240, %v302
        %v322 = vsub.f32 1.0, %v321
        %v323 = vmul.f32 %v232, %v322
        %v324 = vsub.f32 1.0, %v302
        %v325 = vmul.f32 %v240, %v324
        %v326 = vsub.f32 1.0, %v325
        %v327 = vmul.f32 %v232, %v326
        %vm328 = vcmp.eq.f32.partialorder %v318, 0.0
        %vm329 = vcmp.eq.f32.partialorder %v318, 1.0
        %vm330 = vcmp.eq.f32.partialorder %v318, 2.0
        %vm331 = vcmp.eq.f32.partialorder %v318, 3.0
        %vm332 = vcmp.eq.f32.partialorder %v318, 4.0
        %v333 = vsel %vm332, %v327, %v232
        %v334 = vsel %vm331, %v320, %v333
        %v335 = vsel %vm330, %v320, %v334
        %v336 = vsel %vm329, %v323, %v335
        %v337 = vsel %vm328, %v232, %v336
        %v338 = vsel %vm331, %v323, %v320
        %v339 = vsel %vm330, %v232, %v338
        %v340 = vsel %vm329, %v232, %v339
        %v341 = vsel %vm328, %v327, %v340
        %v342 = vsel %vm332, %v232, %v323
        %v343 = vsel %vm331, %v232, %v342
        %v344 = vsel %vm330, %v327, %v343
        %v345 = vsel %vm329, %v320, %v344
        %v346 = vsel %vm328, %v320, %v345
        %347 = vst [vmem:[%s164] sm:$0x3] %v337
        %s348 = scalar_lea.vmem %s164, 2
        %349 = vst [vmem:[%s348] sm:$0x3] %v341
        %s350 = scalar_lea.vmem %s164, 4
        %351 = vst [vmem:[%s350] sm:$0x3] %v346
        %s352 = scalar_lea.vmem %s156, 6
        %v353 = vld [vmem:[%s352] sm:$0x3]
        %s354 = scalar_lea.vmem %s164, 6
        %355 = vst [vmem:[%s354] sm:$0x3] %v353
      $region28: #{multi_stream_augmentation.5} parent=23 // pred_fallthru
        _
      %p356 = scmp.le.s32.totalorder %s165, 0
      // Predicated region
      $region29: #{multi_stream_augmentation.5} parent=23 // pred_check
        %p357 = pneg %p356
      $region30: #{multi_stream_augmentation.5} parent=23 // pred_check_branch
        %359 = sbr.rel (%p357) target = $region32
      $region31: #{multi_stream_augmentation.5} parent=23 // pred_region
        %v360 = vld [vmem:[%s156] sm:$0x3]
        %v361 = vld [vmem:[%s156 + $0x2] sm:$0x3]
        %v362 = vld [vmem:[%s156 + $0x4] sm:$0x3]
        %v363 = vld [vmem:[%s156 + $0x6] sm:$0x3]
        %364 = vst [vmem:[%s164] sm:$0x3] %v360
        %365 = vst [vmem:[%s164 + $0x2] sm:$0x3] %v361
        %366 = vst [vmem:[%s164 + $0x4] sm:$0x3] %v362
        %367 = vst [vmem:[%s164 + $0x6] sm:$0x3] %v363
      $region32: #{multi_stream_augmentation.5} parent=23 // pred_fallthru
        _
      %p368 = scmp.lt.s32.totalorder %s33, 1
      %s369 = scalar_select %p368, %s33, 1
      %p370 = scmp.lt.s32.totalorder %s34, 0
      %s371 = scalar_select %p370, %s34, 0
      %s372 = smul.addr %s369, 4
      %s373 = sadd.s32 %s371, %s372
      %s374 = smul.addr %s373, 2
      %s375 = scalar_lea.vmem %s4, %s374
      // Predicated region
      $region33: #{multi_stream_augmentation.5} parent=23 // pred_check
        %p376 = pneg %p89
      $region34: #{multi_stream_augmentation.5} parent=23 // pred_check_branch
        %378 = sbr.rel (%p376) target = $region36
      $region35: #{multi_stream_augmentation.5} parent=23 // pred_region
        _
      $region36: #{multi_stream_augmentation.5} parent=23 // pred_fallthru
        _
    $region24: #{multi_stream_augmentation.5} parent=5 // pred_fallthru
      _
    %p379 = scmp.le.s32.totalorder 2, %s24
    // Predicated region
    $region37: #{multi_stream_augmentation.5} parent=5 // pred_check
      %p380 = pneg %p379
    $region38: #{multi_stream_augmentation.5} parent=5 // pred_check_branch
      %382 = sbr.rel (%p380) target = $region40
    $region39: #{multi_stream_augmentation.5} parent=5 // pred_region
      %s383 = ssub.s32 %s24, 2
      // Predicated region
      $region41: #{multi_stream_augmentation.5} parent=39 // pred_check
        %p384 = pneg %p95
      $region42: #{multi_stream_augmentation.5} parent=39 // pred_check_branch
        %386 = sbr.rel (%p384) target = $region44
      $region43: #{multi_stream_augmentation.5} parent=39 // pred_region
        %p387 = scmp.lt.s32.totalorder %s35, 1
        %s388 = scalar_select %p387, %s35, 1
        %p389 = scmp.lt.s32.totalorder %s36, 0
        %s390 = scalar_select %p389, %s36, 0
        %s391 = smul.addr %s388, 4
        %s392 = sadd.s32 %s390, %s391
        %s393 = smul.addr %s392, 2
        %s394 = scalar_lea.vmem %s4, %s393
      $region44: #{multi_stream_augmentation.5} parent=39 // pred_fallthru
        _
    $region40: #{multi_stream_augmentation.5} parent=5 // pred_fallthru
      _
  $region6: #{multi_stream_augmentation.5} parent=0 // loop_footer
    %s28 = sadd.s32 1, %s24
  $region7: #{multi_stream_augmentation.5} parent=0 // loop_footer_branch
    %23 = sbr.rel target = $region3
  $region8: #{multi_stream_augmentation.5} parent=0 // loop_exit
    _

</llo_original>
